<compile_context>
chip_gen: v7x
topology: tpu7x:2x2x1
jax: 0.10.0
libtpu: 0.0.40
codegen_flags: <defaults>
</compile_context>

<pallas_src>
import functools

import jax
import jax.numpy as jnp
from jax.experimental import pallas as pl
from jax.experimental.pallas import tpu as pltpu


# Use the per-group matmul path only when the per-group K is MXU-worthy; otherwise a
# zero-padded block-diagonal dense matmul fills the MXU better (e.g. ResNeXt cin_g=4).
_GROUPED_MIN_CIN = 128

_VMEM_BUDGET_CACHE = []


def _round_up(x, m):
    return ((x + m - 1) // m) * m


def _vmem_budget():
    """Scoped-VMEM budget derived from physical VMEM (128 MiB v5e/v6e, 64 MiB v7x)."""
    if not _VMEM_BUDGET_CACHE:
        phys = 64 * 2**20  # conservative fallback (v7x-sized)
        try:
            info = pltpu.get_tpu_info()
            cap = getattr(info, "vmem_capacity_bytes", None)
            if cap:
                phys = int(cap)
        except Exception:
            pass
        _VMEM_BUDGET_CACHE.append(min((phys * 3) // 4, 100 * 2**20))
    return _VMEM_BUDGET_CACHE[0]


def _cparams(vmem_limit):
    return pltpu.CompilerParams(
        dimension_semantics=("parallel",),
        vmem_limit_bytes=int(vmem_limit),
    )


def _pick_tm(M, in_cols, out_cols, weight_elems, itemsize, budget, tm_max=1024):
    """Largest MXU-aligned row tile (multiple of 256) whose working set fits the budget."""
    tm = tm_max

    def fp(t):
        # double-buffered in/out tiles + double-buffered weights + f32 temporaries headroom
        return (2 * t * (in_cols + out_cols) + 2 * weight_elems) * itemsize + 4 * t * out_cols

    while tm > 256 and fp(tm) > (budget * 3) // 4:
        tm //= 2
    return min(tm, max(8, _round_up(M, 8)))


# ----------------------------------------------------------------------------
# Kernel bodies
# ----------------------------------------------------------------------------
def _mm_bias_kernel(x_ref, w_ref, b_ref, o_ref, *, relu):
    # x: (TM, Cin), w: (Cin, Cout) (BN scale pre-folded), b: (1, Cout) f32
    y = jnp.dot(x_ref[...], w_ref[...], preferred_element_type=jnp.float32)
    y = y + b_ref[...]
    if relu:
        y = jnp.maximum(y, 0.0)
    o_ref[...] = y.astype(o_ref.dtype)


def _mm_bias_add_relu_kernel(x_ref, w_ref, b_ref, res_ref, o_ref):
    # conv3 + bn3 + residual add + final relu (identity already has the right channels).
    y = jnp.dot(x_ref[...], w_ref[...], preferred_element_type=jnp.float32) + b_ref[...]
    y = y + res_ref[...].astype(jnp.float32)
    o_ref[...] = jnp.maximum(y, 0.0).astype(o_ref.dtype)


def _mm2_bias_relu_kernel(x_ref, w_ref, xs_ref, wd_ref, b_ref, o_ref):
    # conv3 + bn3 fused with the downsample 1x1 + bnd + add + relu.  Both matmuls accumulate
    # into one f32 tile and the two BN biases are pre-folded into a single bias vector, so
    # only one (TM, Cout) f32 temporary is live and the identity never touches HBM.
    y = jnp.dot(x_ref[...], w_ref[...], preferred_element_type=jnp.float32)
    y = y + jnp.dot(xs_ref[...], wd_ref[...], preferred_element_type=jnp.float32)
    y = y + b_ref[...]
    o_ref[...] = jnp.maximum(y, 0.0).astype(o_ref.dtype)


def _conv3x3_flat_dense_kernel(x_ref, w_ref, b_ref, o_ref, *, M, Wp, dil):
    # x_ref: (1, L, C) row-flattened padded image; w_ref: (9, C, Cout) tap-major (block-diag
    # across groups when groups > 1); b_ref: (1, Cout); o_ref: (1, M, Cout), M = H*Wp rows.
    # Nine accumulated K=C dots — no (M, 9C) im2col buffer, ~9x less live VMEM.
    acc = None
    for t in range(9):
        ky, kx = divmod(t, 3)
        off = (ky * Wp + kx) * dil
        part = jnp.dot(x_ref[0, off:off + M, :], w_ref[t],
                       preferred_element_type=jnp.float32)
        acc = part if acc is None else acc + part
    y = acc + b_ref[...]
    o_ref[0] = jnp.maximum(y, 0.0).astype(o_ref.dtype)


def _conv3x3_flat_grouped_kernel(x_ref, w_ref, b_ref, o_ref, *, M, Wp, dil, groups):
    # Per-group, per-tap accumulated dots (used only when cin_g >= _GROUPED_MIN_CIN so each
    # dot keeps the MXU busy).  w_ref: (groups*9, cin_g, cout_g), tap-major within a group.
    C = x_ref.shape[-1]
    cin_g = C // groups
    cols = []
    for g in range(groups):
        acc = None
        for t in range(9):
            ky, kx = divmod(t, 3)
            off = (ky * Wp + kx) * dil
            part = jnp.dot(x_ref[0, off:off + M, g * cin_g:(g + 1) * cin_g],
                           w_ref[g * 9 + t], preferred_element_type=jnp.float32)
            acc = part if acc is None else acc + part
        cols.append(acc)
    y = jnp.concatenate(cols, axis=-1) + b_ref[...]
    o_ref[0] = jnp.maximum(y, 0.0).astype(o_ref.dtype)


# ----------------------------------------------------------------------------
# pallas_call wrappers
# ----------------------------------------------------------------------------
def conv1x1_bn(x_nhwc, w, bias, *, relu, compute_dtype):
    """1x1 conv (bias-free, BN scale pre-folded into w) + bias (+ relu)."""
    N, H, W, Cin = x_nhwc.shape
    Cout = w.shape[1]
    M = N * H * W
    xm = x_nhwc.reshape(M, Cin).astype(compute_dtype)

    itemsize = jnp.dtype(compute_dtype).itemsize
    budget = _vmem_budget()
    TM = _pick_tm(M, Cin, Cout, Cin * Cout, itemsize, budget)

    out = pl.pallas_call(
        functools.partial(_mm_bias_kernel, relu=relu),
        out_shape=jax.ShapeDtypeStruct((M, Cout), compute_dtype),
        grid=(pl.cdiv(M, TM),),
        in_specs=[pl.BlockSpec((TM, Cin), lambda i: (i, 0)),
                  pl.BlockSpec((Cin, Cout), lambda i: (0, 0)),
                  pl.BlockSpec((1, Cout), lambda i: (0, 0))],
        out_specs=pl.BlockSpec((TM, Cout), lambda i: (i, 0)),
        compiler_params=_cparams(budget),
    )(xm, w.astype(compute_dtype), bias.reshape(1, Cout).astype(jnp.float32))
    return out.reshape(N, H, W, Cout)


def conv1x1_bn_residual(h, w3, b3, residual, out_dtype, *, wd=None, bd=None, compute_dtype):
    """conv3 (1x1) + bn3, fused with the (optional) downsample 1x1 + bnd, add, relu."""
    N, Ho, Wo, Cb = h.shape
    Cout = w3.shape[1]
    M = N * Ho * Wo
    hm = h.reshape(M, Cb).astype(compute_dtype)
    rm = residual.reshape(M, residual.shape[-1])

    itemsize = jnp.dtype(compute_dtype).itemsize
    budget = _vmem_budget()

    h_spec = pl.BlockSpec((0, Cb), lambda i: (i, 0))  # block row-size patched below
    w_spec = pl.BlockSpec((Cb, Cout), lambda i: (0, 0))
    v_spec = pl.BlockSpec((1, Cout), lambda i: (0, 0))

    if wd is None:
        assert residual.shape[-1] == Cout, "identity channel count must equal out_channels"
        TM = _pick_tm(M, Cb + Cout, Cout, Cb * Cout, itemsize, budget)
        out = pl.pallas_call(
            _mm_bias_add_relu_kernel,
            out_shape=jax.ShapeDtypeStruct((M, Cout), out_dtype),
            grid=(pl.cdiv(M, TM),),
            in_specs=[pl.BlockSpec((TM, Cb), lambda i: (i, 0)),
                      w_spec, v_spec,
                      pl.BlockSpec((TM, Cout), lambda i: (i, 0))],
            out_specs=pl.BlockSpec((TM, Cout), lambda i: (i, 0)),
            compiler_params=_cparams(budget),
        )(hm, w3.astype(compute_dtype),
          b3.reshape(1, Cout).astype(jnp.float32), rm)
    else:
        Cin = rm.shape[1]
        # Pre-fold both BN biases into one vector; both matmuls share one f32 accumulator.
        bias = (b3 + bd).reshape(1, Cout).astype(jnp.float32)
        TM = _pick_tm(M, Cb + Cin + Cout, Cout, (Cb + Cin) * Cout, itemsize, budget)
        out = pl.pallas_call(
            _mm2_bias_relu_kernel,
            out_shape=jax.ShapeDtypeStruct((M, Cout), out_dtype),
            grid=(pl.cdiv(M, TM),),
            in_specs=[pl.BlockSpec((TM, Cb), lambda i: (i, 0)),
                      w_spec,
                      pl.BlockSpec((TM, Cin), lambda i: (i, 0)),
                      pl.BlockSpec((Cin, Cout), lambda i: (0, 0)),
                      v_spec],
            out_specs=pl.BlockSpec((TM, Cout), lambda i: (i, 0)),
            compiler_params=_cparams(budget),
        )(hm, w3.astype(compute_dtype), rm.astype(compute_dtype),
          wd.astype(compute_dtype), bias)
    return out.reshape(N, Ho, Wo, Cout)


def conv3x3_bn_relu(x_nhwc, w, bias, *, stride, dilation, groups, compute_dtype):
    """3x3 grouped dilated conv (padding=dilation, bias-free, BN scale folded) + bias + relu.

    w: (9, groups, cin_g, cout_g), taps ordered ky*3+kx.
    Grid is over the batch (marked parallel so v7x's 2 TensorCores split it); each step
    holds one padded image in VMEM and runs 9 accumulated K=C (or K=cin_g) matmuls built
    from static shifted slices of the row-flattened image — no im2col tensor anywhere.
    """
    N, H, W, C = x_nhwc.shape
    cin_g = C // groups
    cout_g = w.shape[-1]
    Cout = groups * cout_g
    d = dilation

    # TODO(synk): stride>1 in the 3x3 conv (stride_in_1x1=False configs) falls back to the
    # stride-1 kernel followed by an output subsample; no dedicated strided kernel.

    # Pad H by (d, d+1) and W by (d, d): the extra bottom row keeps every shifted tap slice
    # of the row-flattened image in bounds.
    xpad = jnp.pad(x_nhwc.astype(compute_dtype), ((0, 0), (d, d + 1), (d, d), (0, 0)))
    Wp = W + 2 * d
    L = (H + 2 * d + 1) * Wp
    M = H * Wp                       # output rows, incl. (Wp - W) junk columns per row
    xflat = xpad.reshape(N, L, C)    # free reshape (row-major)
    b2 = bias.reshape(1, Cout).astype(jnp.float32)
    budget = _vmem_budget()

    use_grouped = groups > 1 and cin_g >= _GROUPED_MIN_CIN
    if use_grouped:
        # Per-group dots: avoids inflating weight VMEM / MXU FLOPs by `groups`x.
        wk = jnp.transpose(w, (1, 0, 2, 3)).reshape(groups * 9, cin_g, cout_g)
        wk = wk.astype(compute_dtype)
        kern = functools.partial(_conv3x3_flat_grouped_kernel, M=M, Wp=Wp, dil=d,
                                 groups=groups)
        w_spec = pl.BlockSpec((groups * 9, cin_g, cout_g), lambda n: (0, 0, 0))
    else:
        # Small cin_g (e.g. ResNeXt): block-diagonal dense weight keeps the MXU full even
        # though it carries zero padding.
        wdense = jnp.zeros((9, C, Cout), w.dtype)
        for gi in range(groups):
            wdense = wdense.at[:, gi * cin_g:(gi + 1) * cin_g,
                               gi * cout_g:(gi + 1) * cout_g].set(w[:, gi])
        wk = wdense.astype(compute_dtype)
        kern = functools.partial(_conv3x3_flat_dense_kernel, M=M, Wp=Wp, dil=d)
        w_spec = pl.BlockSpec((9, C, Cout), lambda n: (0, 0, 0))

    out = pl.pallas_call(
        kern,
        out_shape=jax.ShapeDtypeStruct((N, M, Cout), compute_dtype),
        grid=(N,),
        in_specs=[pl.BlockSpec((1, L, C), lambda n: (n, 0, 0)),
                  w_spec,
                  pl.BlockSpec((1, Cout), lambda n: (0, 0))],
        out_specs=pl.BlockSpec((1, M, Cout), lambda n: (n, 0, 0)),
        compiler_params=_cparams(budget),
    )(xflat, wk, b2)

    out = out.reshape(N, H, Wp, Cout)
    # TODO(synk): the junk-column drop stays wrapper-side (an in-kernel (M,Cout)->(H,Wp,Cout)
    # reshape would relayout across non-8-aligned sublane tiles); one extra slice pass.
    return out[:, ::stride, :W:stride, :]


# ----------------------------------------------------------------------------
# Bottleneck forward (matches the PyTorch module's forward semantics)
# ----------------------------------------------------------------------------
def bottleneck_forward(x_nchw, params, *, stride, dilation, stride_in_1x1, num_groups,
                       compute_dtype=jnp.bfloat16):
    # TODO(synk): NCHW<->NHWC boundary transposes kept for PyTorch parity; drop them if the
    # surrounding model stays NHWC end-to-end.
    x = jnp.transpose(x_nchw, (0, 2, 3, 1))
    out_dtype = x.dtype

    down_stride = stride if dilation == 1 else 1
    s = 1 if dilation > 1 else stride
    s1, s2 = (s, 1) if stride_in_1x1 else (1, s)

    g = num_groups
    cout_g = params["w2"].shape[-1]

    # Fold the frozen-BN per-channel scale into the conv weights at trace time.
    w1 = params["w1"] * params["s1"][None, :]
    w2 = params["w2"] * params["s2"].reshape(g, cout_g)[None, :, None, :]
    w3 = params["w3"] * params["s3"][None, :]

    # Strided spatial subsample of x, done at most once and shared between the strided 1x1
    # conv1 and the fused downsample branch.
    xs1 = x[:, ::s1, ::s1, :] if s1 > 1 else x

    out = conv1x1_bn(xs1, w1, params["b1"], relu=True, compute_dtype=compute_dtype)
    out = conv3x3_bn_relu(out, w2, params["b2"], stride=s2, dilation=dilation,
                          groups=g, compute_dtype=compute_dtype)

    if "wd" in params:
        wd = params["wd"] * params["sd"][None, :]
        if down_stride == s1:
            x_down = xs1
        elif down_stride > 1:
            x_down = x[:, ::down_stride, ::down_stride, :]
        else:
            x_down = x
        out = conv1x1_bn_residual(out, w3, params["b3"], x_down, out_dtype,
                                  wd=wd, bd=params["bd"], compute_dtype=compute_dtype)
    else:
        out = conv1x1_bn_residual(out, w3, params["b3"], x, out_dtype,
                                  compute_dtype=compute_dtype)
    return jnp.transpose(out, (0, 3, 1, 2))


# ----------------------------------------------------------------------------
# Deterministic parameter init (kaiming_uniform with a=1, frozen-BN folded)
# ----------------------------------------------------------------------------
def init_bottleneck_params(key, in_c, bott_c, out_c, groups):
    ks = jax.random.split(key, 8)

    def kunif(k, shape, fan_in):
        bound = (3.0 / fan_in) ** 0.5  # kaiming_uniform_(a=1)
        return jax.random.uniform(k, shape, jnp.float32, -bound, bound)

    def frozen_bn(k, c):
        k1, k2, k3, k4 = jax.random.split(k, 4)
        gamma = jax.random.uniform(k1, (c,), jnp.float32, 0.5, 1.5)
        beta = 0.1 * jax.random.normal(k2, (c,), jnp.float32)
        mean = 0.1 * jax.random.normal(k3, (c,), jnp.float32)
        var = jax.random.uniform(k4, (c,), jnp.float32, 0.5, 1.5)
        scale = gamma * jax.lax.rsqrt(var + 1e-5)
        bias = beta - mean * scale
        return scale, bias

    cin_g = bott_c // groups
    cout_g = bott_c // groups

    p = {}
    p["w1"] = kunif(ks[0], (in_c, bott_c), in_c)                       # 1x1
    p["s1"], p["b1"] = frozen_bn(ks[1], bott_c)
    p["w2"] = kunif(ks[2], (9, groups, cin_g, cout_g), cin_g * 9)      # 3x3 grouped
    p["s2"], p["b2"] = frozen_bn(ks[3], bott_c)
    p["w3"] = kunif(ks[4], (bott_c, out_c), bott_c)                    # 1x1
    p["s3"], p["b3"] = frozen_bn(ks[5], out_c)
    if in_c != out_c:
        p["wd"] = kunif(ks[6], (in_c, out_c), in_c)                    # downsample 1x1
        p["sd"], p["bd"] = frozen_bn(ks[7], out_c)
    return p


# ----------------------------------------------------------------------------
# Pure-JAX reference (mirrors the PyTorch forward) for verification
# ----------------------------------------------------------------------------
def reference_forward(x_nchw, params, *, stride, dilation, stride_in_1x1, num_groups):
    prec = jax.lax.Precision.HIGHEST

    def conv(x, w_oihw, s, pad=0, dil=1, grp=1):
        return jax.lax.conv_general_dilated(
            x, w_oihw, window_strides=(s, s),
            padding=((pad, pad), (pad, pad)),
            rhs_dilation=(dil, dil),
            dimension_numbers=("NCHW", "OIHW", "NCHW"),
            feature_group_count=grp, precision=prec)

    def bn(x, scale, bias):
        return x * scale[None, :, None, None] + bias[None, :, None, None]

    down_stride = stride if dilation == 1 else 1
    s = 1 if dilation > 1 else stride
    s1, s2 = (s, 1) if stride_in_1x1 else (1, s)

    g = num_groups
    _, _, cin_g, cout_g = params["w2"].shape
    w1 = params["w1"].T[:, :, None, None]
    w3 = params["w3"].T[:, :, None, None]
    w2 = (params["w2"].reshape(3, 3, g, cin_g, cout_g)
          .transpose(2, 4, 3, 0, 1).reshape(g * cout_g, cin_g, 3, 3))

    out = jax.nn.relu(bn(conv(x_nchw, w1, s1), params["s1"], params["b1"]))
    out = jax.nn.relu(bn(conv(out, w2, s2, pad=dilation, dil=dilation, grp=g),
                         params["s2"], params["b2"]))
    out = bn(conv(out, w3, 1), params["s3"], params["b3"])
    if "wd" in params:
        wd = params["wd"].T[:, :, None, None]
        identity = bn(conv(x_nchw, wd, down_stride), params["sd"], params["bd"])
    else:
        identity = x_nchw
    return jax.nn.relu(out + identity)


# ----------------------------------------------------------------------------
if __name__ == "__main__":
    import numpy as np

    key = jax.random.PRNGKey(0)
    N, H, W = 2, 8, 8
    configs = [
        dict(in_c=16, bott_c=8, out_c=32, groups=2, stride=2, dilation=1, stride_in_1x1=True),
        dict(in_c=32, bott_c=8, out_c=32, groups=1, stride=1, dilation=1, stride_in_1x1=True),
        dict(in_c=16, bott_c=8, out_c=32, groups=2, stride=1, dilation=2, stride_in_1x1=True),
        dict(in_c=16, bott_c=8, out_c=32, groups=2, stride=2, dilation=1, stride_in_1x1=False),
        # large per-group channels -> exercises the per-group (non-block-diag) 3x3 path
        dict(in_c=64, bott_c=256, out_c=128, groups=2, stride=1, dilation=1, stride_in_1x1=True),
    ]

    for ci, cfg in enumerate(configs):
        key, kx, kp = jax.random.split(key, 3)
        x = jax.random.normal(kx, (N, cfg["in_c"], H, W), jnp.float32)
        params = init_bottleneck_params(kp, cfg["in_c"], cfg["bott_c"], cfg["out_c"],
                                        cfg["groups"])
        y_ref = reference_forward(x, params, stride=cfg["stride"], dilation=cfg["dilation"],
                                  stride_in_1x1=cfg["stride_in_1x1"],
                                  num_groups=cfg["groups"])

        # bf16 compute (default) everywhere; additionally exercise f32 on the main config.
        dtypes = [(jnp.bfloat16, 1e-1)]
        if ci == 0:
            dtypes.append((jnp.float32, 2e-2))

        for dt, tol in dtypes:
            fwd = jax.jit(functools.partial(
                bottleneck_forward, stride=cfg["stride"], dilation=cfg["dilation"],
                stride_in_1x1=cfg["stride_in_1x1"], num_groups=cfg["groups"],
                compute_dtype=dt))
            y = jax.block_until_ready(fwd(x, params))
            assert y.shape == y_ref.shape, (y.shape, y_ref.shape)
            np.testing.assert_allclose(np.asarray(y), np.asarray(y_ref),
                                       rtol=tol, atol=tol)

    print("KERNEL_OK")
</pallas_src>

<mosaic_0001>
module attributes {stable_mosaic.version = 11 : i64} {
  func.func @_conv3x3_flat_dense_kernel(%arg0: i32, %arg1: memref<1x42x8xbf16, #tpu.memory_space<vmem>>, %arg2: memref<9x8x8xbf16, #tpu.memory_space<vmem>>, %arg3: memref<1x8xf32, #tpu.memory_space<vmem>>, %arg4: memref<1x24x8xbf16, #tpu.memory_space<vmem>>) attributes {dimension_semantics = [#tpu.dimension_semantics<parallel>], iteration_bounds = array<i64: 2>, scalar_prefetch = 0 : i64, scratch_operands = 0 : i64, tpu.core_type = #tpu.core_type<tc>, window_params = [{transform_indices = @transform_0, window_bounds = array<i64: 1, 42, 8>}, {pipeline_mode = #tpu.pipeline_mode<synchronous>, transform_indices = @transform_1, window_bounds = array<i64: 9, 8, 8>}, {pipeline_mode = #tpu.pipeline_mode<synchronous>, transform_indices = @transform_2, window_bounds = array<i64: 1, 8>}, {transform_indices = @transform_3, window_bounds = array<i64: 1, 24, 8>}]} {
    %c0 = arith.constant 0 : index
    %c0_0 = arith.constant 0 : index
    %c0_1 = arith.constant 0 : index
    %0 = vector.load %arg1[%c0, %c0_0, %c0_1] : memref<1x42x8xbf16, #tpu.memory_space<vmem>>, vector<1x24x8xbf16>
    %1 = vector.shape_cast %0 : vector<1x24x8xbf16> to vector<24x8xbf16>
    %c0_2 = arith.constant 0 : index
    %c0_3 = arith.constant 0 : index
    %c0_4 = arith.constant 0 : index
    %2 = vector.load %arg2[%c0_2, %c0_3, %c0_4] : memref<9x8x8xbf16, #tpu.memory_space<vmem>>, vector<1x8x8xbf16>
    %3 = vector.shape_cast %2 : vector<1x8x8xbf16> to vector<8x8xbf16>
    %cst = arith.constant dense<0.000000e+00> : vector<24x8xf32>
    %4 = tpu.matmul %1, %3, %cst {dimension_numbers = #tpu.dot_dimension_numbers<[1], [0], [0], [1], [0, 0, 1, 1], [], []>} : vector<24x8xbf16>, vector<8x8xbf16>, vector<24x8xf32> -> vector<24x8xf32>
    %c0_5 = arith.constant 0 : index
    %c1 = arith.constant 1 : index
    %c0_6 = arith.constant 0 : index
    %5 = vector.load %arg1[%c0_5, %c1, %c0_6] : memref<1x42x8xbf16, #tpu.memory_space<vmem>>, vector<1x24x8xbf16>
    %6 = vector.shape_cast %5 : vector<1x24x8xbf16> to vector<24x8xbf16>
    %c1_7 = arith.constant 1 : index
    %c0_8 = arith.constant 0 : index
    %c0_9 = arith.constant 0 : index
    %7 = vector.load %arg2[%c1_7, %c0_8, %c0_9] : memref<9x8x8xbf16, #tpu.memory_space<vmem>>, vector<1x8x8xbf16>
    %8 = vector.shape_cast %7 : vector<1x8x8xbf16> to vector<8x8xbf16>
    %cst_10 = arith.constant dense<0.000000e+00> : vector<24x8xf32>
    %9 = tpu.matmul %6, %8, %cst_10 {dimension_numbers = #tpu.dot_dimension_numbers<[1], [0], [0], [1], [0, 0, 1, 1], [], []>} : vector<24x8xbf16>, vector<8x8xbf16>, vector<24x8xf32> -> vector<24x8xf32>
    %10 = arith.addf %4, %9 : vector<24x8xf32>
    %c0_11 = arith.constant 0 : index
    %c2 = arith.constant 2 : index
    %c0_12 = arith.constant 0 : index
    %11 = vector.load %arg1[%c0_11, %c2, %c0_12] : memref<1x42x8xbf16, #tpu.memory_space<vmem>>, vector<1x24x8xbf16>
    %12 = vector.shape_cast %11 : vector<1x24x8xbf16> to vector<24x8xbf16>
    %c2_13 = arith.constant 2 : index
    %c0_14 = arith.constant 0 : index
    %c0_15 = arith.constant 0 : index
    %13 = vector.load %arg2[%c2_13, %c0_14, %c0_15] : memref<9x8x8xbf16, #tpu.memory_space<vmem>>, vector<1x8x8xbf16>
    %14 = vector.shape_cast %13 : vector<1x8x8xbf16> to vector<8x8xbf16>
    %cst_16 = arith.constant dense<0.000000e+00> : vector<24x8xf32>
    %15 = tpu.matmul %12, %14, %cst_16 {dimension_numbers = #tpu.dot_dimension_numbers<[1], [0], [0], [1], [0, 0, 1, 1], [], []>} : vector<24x8xbf16>, vector<8x8xbf16>, vector<24x8xf32> -> vector<24x8xf32>
    %16 = arith.addf %10, %15 : vector<24x8xf32>
    %c0_17 = arith.constant 0 : index
    %c6 = arith.constant 6 : index
    %c0_18 = arith.constant 0 : index
    %17 = vector.load %arg1[%c0_17, %c6, %c0_18] : memref<1x42x8xbf16, #tpu.memory_space<vmem>>, vector<1x24x8xbf16>
    %18 = vector.shape_cast %17 : vector<1x24x8xbf16> to vector<24x8xbf16>
    %c3 = arith.constant 3 : index
    %c0_19 = arith.constant 0 : index
    %c0_20 = arith.constant 0 : index
    %19 = vector.load %arg2[%c3, %c0_19, %c0_20] : memref<9x8x8xbf16, #tpu.memory_space<vmem>>, vector<1x8x8xbf16>
    %20 = vector.shape_cast %19 : vector<1x8x8xbf16> to vector<8x8xbf16>
    %cst_21 = arith.constant dense<0.000000e+00> : vector<24x8xf32>
    %21 = tpu.matmul %18, %20, %cst_21 {dimension_numbers = #tpu.dot_dimension_numbers<[1], [0], [0], [1], [0, 0, 1, 1], [], []>} : vector<24x8xbf16>, vector<8x8xbf16>, vector<24x8xf32> -> vector<24x8xf32>
    %22 = arith.addf %16, %21 : vector<24x8xf32>
    %c0_22 = arith.constant 0 : index
    %c7 = arith.constant 7 : index
    %c0_23 = arith.constant 0 : index
    %23 = vector.load %arg1[%c0_22, %c7, %c0_23] : memref<1x42x8xbf16, #tpu.memory_space<vmem>>, vector<1x24x8xbf16>
    %24 = vector.shape_cast %23 : vector<1x24x8xbf16> to vector<24x8xbf16>
    %c4 = arith.constant 4 : index
    %c0_24 = arith.constant 0 : index
    %c0_25 = arith.constant 0 : index
    %25 = vector.load %arg2[%c4, %c0_24, %c0_25] : memref<9x8x8xbf16, #tpu.memory_space<vmem>>, vector<1x8x8xbf16>
    %26 = vector.shape_cast %25 : vector<1x8x8xbf16> to vector<8x8xbf16>
    %cst_26 = arith.constant dense<0.000000e+00> : vector<24x8xf32>
    %27 = tpu.matmul %24, %26, %cst_26 {dimension_numbers = #tpu.dot_dimension_numbers<[1], [0], [0], [1], [0, 0, 1, 1], [], []>} : vector<24x8xbf16>, vector<8x8xbf16>, vector<24x8xf32> -> vector<24x8xf32>
    %28 = arith.addf %22, %27 : vector<24x8xf32>
    %c0_27 = arith.constant 0 : index
    %c8 = arith.constant 8 : index
    %c0_28 = arith.constant 0 : index
    %29 = vector.load %arg1[%c0_27, %c8, %c0_28] : memref<1x42x8xbf16, #tpu.memory_space<vmem>>, vector<1x24x8xbf16>
    %30 = vector.shape_cast %29 : vector<1x24x8xbf16> to vector<24x8xbf16>
    %c5 = arith.constant 5 : index
    %c0_29 = arith.constant 0 : index
    %c0_30 = arith.constant 0 : index
    %31 = vector.load %arg2[%c5, %c0_29, %c0_30] : memref<9x8x8xbf16, #tpu.memory_space<vmem>>, vector<1x8x8xbf16>
    %32 = vector.shape_cast %31 : vector<1x8x8xbf16> to vector<8x8xbf16>
    %cst_31 = arith.constant dense<0.000000e+00> : vector<24x8xf32>
    %33 = tpu.matmul %30, %32, %cst_31 {dimension_numbers = #tpu.dot_dimension_numbers<[1], [0], [0], [1], [0, 0, 1, 1], [], []>} : vector<24x8xbf16>, vector<8x8xbf16>, vector<24x8xf32> -> vector<24x8xf32>
    %34 = arith.addf %28, %33 : vector<24x8xf32>
    %c0_32 = arith.constant 0 : index
    %c12 = arith.constant 12 : index
    %c0_33 = arith.constant 0 : index
    %35 = vector.load %arg1[%c0_32, %c12, %c0_33] : memref<1x42x8xbf16, #tpu.memory_space<vmem>>, vector<1x24x8xbf16>
    %36 = vector.shape_cast %35 : vector<1x24x8xbf16> to vector<24x8xbf16>
    %c6_34 = arith.constant 6 : index
    %c0_35 = arith.constant 0 : index
    %c0_36 = arith.constant 0 : index
    %37 = vector.load %arg2[%c6_34, %c0_35, %c0_36] : memref<9x8x8xbf16, #tpu.memory_space<vmem>>, vector<1x8x8xbf16>
    %38 = vector.shape_cast %37 : vector<1x8x8xbf16> to vector<8x8xbf16>
    %cst_37 = arith.constant dense<0.000000e+00> : vector<24x8xf32>
    %39 = tpu.matmul %36, %38, %cst_37 {dimension_numbers = #tpu.dot_dimension_numbers<[1], [0], [0], [1], [0, 0, 1, 1], [], []>} : vector<24x8xbf16>, vector<8x8xbf16>, vector<24x8xf32> -> vector<24x8xf32>
    %40 = arith.addf %34, %39 : vector<24x8xf32>
    %c0_38 = arith.constant 0 : index
    %c13 = arith.constant 13 : index
    %c0_39 = arith.constant 0 : index
    %41 = vector.load %arg1[%c0_38, %c13, %c0_39] : memref<1x42x8xbf16, #tpu.memory_space<vmem>>, vector<1x24x8xbf16>
    %42 = vector.shape_cast %41 : vector<1x24x8xbf16> to vector<24x8xbf16>
    %c7_40 = arith.constant 7 : index
    %c0_41 = arith.constant 0 : index
    %c0_42 = arith.constant 0 : index
    %43 = vector.load %arg2[%c7_40, %c0_41, %c0_42] : memref<9x8x8xbf16, #tpu.memory_space<vmem>>, vector<1x8x8xbf16>
    %44 = vector.shape_cast %43 : vector<1x8x8xbf16> to vector<8x8xbf16>
    %cst_43 = arith.constant dense<0.000000e+00> : vector<24x8xf32>
    %45 = tpu.matmul %42, %44, %cst_43 {dimension_numbers = #tpu.dot_dimension_numbers<[1], [0], [0], [1], [0, 0, 1, 1], [], []>} : vector<24x8xbf16>, vector<8x8xbf16>, vector<24x8xf32> -> vector<24x8xf32>
    %46 = arith.addf %40, %45 : vector<24x8xf32>
    %c0_44 = arith.constant 0 : index
    %c14 = arith.constant 14 : index
    %c0_45 = arith.constant 0 : index
    %47 = vector.load %arg1[%c0_44, %c14, %c0_45] : memref<1x42x8xbf16, #tpu.memory_space<vmem>>, vector<1x24x8xbf16>
    %48 = vector.shape_cast %47 : vector<1x24x8xbf16> to vector<24x8xbf16>
    %c8_46 = arith.constant 8 : index
    %c0_47 = arith.constant 0 : index
    %c0_48 = arith.constant 0 : index
    %49 = vector.load %arg2[%c8_46, %c0_47, %c0_48] : memref<9x8x8xbf16, #tpu.memory_space<vmem>>, vector<1x8x8xbf16>
    %50 = vector.shape_cast %49 : vector<1x8x8xbf16> to vector<8x8xbf16>
    %cst_49 = arith.constant dense<0.000000e+00> : vector<24x8xf32>
    %51 = tpu.matmul %48, %50, %cst_49 {dimension_numbers = #tpu.dot_dimension_numbers<[1], [0], [0], [1], [0, 0, 1, 1], [], []>} : vector<24x8xbf16>, vector<8x8xbf16>, vector<24x8xf32> -> vector<24x8xf32>
    %52 = arith.addf %46, %51 : vector<24x8xf32>
    %c0_50 = arith.constant 0 : index
    %c0_51 = arith.constant 0 : index
    %53 = vector.load %arg3[%c0_50, %c0_51] : memref<1x8xf32, #tpu.memory_space<vmem>>, vector<1x8xf32>
    %54 = vector.broadcast %53 : vector<1x8xf32> to vector<24x8xf32>
    %55 = arith.addf %52, %54 : vector<24x8xf32>
    %cst_52 = arith.constant 0.000000e+00 : f32
    %56 = vector.broadcast %cst_52 : f32 to vector<24x8xf32>
    %57 = arith.maximumf %55, %56 : vector<24x8xf32>
    %58 = arith.truncf %57 : vector<24x8xf32> to vector<24x8xbf16>
    %c0_53 = arith.constant 0 : index
    %c0_54 = arith.constant 0 : index
    %c0_55 = arith.constant 0 : index
    %59 = vector.load %arg4[%c0_53, %c0_54, %c0_55] : memref<1x24x8xbf16, #tpu.memory_space<vmem>>, vector<1x24x8xbf16>
    %60 = vector.shape_cast %59 : vector<1x24x8xbf16> to vector<24x8xbf16>
    %61 = vector.shape_cast %58 : vector<24x8xbf16> to vector<1x24x8xbf16>
    tpu.vector_store %arg4[%c0_53, %c0_54, %c0_55], %61 {strides = array<i32>} : memref<1x24x8xbf16, #tpu.memory_space<vmem>>, vector<1x24x8xbf16>,
    return
  }
  func.func @transform_0(%arg0: i32) -> (i32, i32, i32) {
    %c0_i32 = arith.constant 0 : i32
    %c0_i32_0 = arith.constant 0 : i32
    %c0_i32_1 = arith.constant 0 : i32
    return %arg0, %c0_i32, %c0_i32_0 : i32, i32, i32
  }
  func.func @transform_1(%arg0: i32) -> (i32, i32, i32) {
    %c0_i32 = arith.constant 0 : i32
    %c0_i32_0 = arith.constant 0 : i32
    %c0_i32_1 = arith.constant 0 : i32
    %c0_i32_2 = arith.constant 0 : i32
    return %c0_i32, %c0_i32_0, %c0_i32_1 : i32, i32, i32
  }
  func.func @transform_2(%arg0: i32) -> (i32, i32) {
    %c0_i32 = arith.constant 0 : i32
    %c0_i32_0 = arith.constant 0 : i32
    %c0_i32_1 = arith.constant 0 : i32
    return %c0_i32, %c0_i32_0 : i32, i32
  }
  func.func @transform_3(%arg0: i32) -> (i32, i32, i32) {
    %c0_i32 = arith.constant 0 : i32
    %c0_i32_0 = arith.constant 0 : i32
    %c0_i32_1 = arith.constant 0 : i32
    return %arg0, %c0_i32, %c0_i32_0 : i32, i32, i32
  }
}

module attributes {stable_mosaic.version = 11 : i64} {
  func.func @_mm_bias_kernel(%arg0: i32, %arg1: memref<32x16xbf16, #tpu.memory_space<vmem>>, %arg2: memref<16x8xbf16, #tpu.memory_space<vmem>>, %arg3: memref<1x8xf32, #tpu.memory_space<vmem>>, %arg4: memref<32x8xbf16, #tpu.memory_space<vmem>>) attributes {dimension_semantics = [#tpu.dimension_semantics<parallel>], iteration_bounds = array<i64: 1>, scalar_prefetch = 0 : i64, scratch_operands = 0 : i64, tpu.core_type = #tpu.core_type<tc>, window_params = [{transform_indices = @transform_0, window_bounds = array<i64: 32, 16>}, {pipeline_mode = #tpu.pipeline_mode<synchronous>, transform_indices = @transform_1, window_bounds = array<i64: 16, 8>}, {pipeline_mode = #tpu.pipeline_mode<synchronous>, transform_indices = @transform_2, window_bounds = array<i64: 1, 8>}, {transform_indices = @transform_3, window_bounds = array<i64: 32, 8>}]} {
    %c0 = arith.constant 0 : index
    %c0_0 = arith.constant 0 : index
    %0 = vector.load %arg1[%c0, %c0_0] : memref<32x16xbf16, #tpu.memory_space<vmem>>, vector<32x16xbf16>
    %c0_1 = arith.constant 0 : index
    %c0_2 = arith.constant 0 : index
    %1 = vector.load %arg2[%c0_1, %c0_2] : memref<16x8xbf16, #tpu.memory_space<vmem>>, vector<16x8xbf16>
    %cst = arith.constant dense<0.000000e+00> : vector<32x8xf32>
    %2 = tpu.matmul %0, %1, %cst {dimension_numbers = #tpu.dot_dimension_numbers<[1], [0], [0], [1], [0, 0, 1, 1], [], []>} : vector<32x16xbf16>, vector<16x8xbf16>, vector<32x8xf32> -> vector<32x8xf32>
    %c0_3 = arith.constant 0 : index
    %c0_4 = arith.constant 0 : index
    %3 = vector.load %arg3[%c0_3, %c0_4] : memref<1x8xf32, #tpu.memory_space<vmem>>, vector<1x8xf32>
    %4 = vector.broadcast %3 : vector<1x8xf32> to vector<32x8xf32>
    %5 = arith.addf %2, %4 : vector<32x8xf32>
    %cst_5 = arith.constant 0.000000e+00 : f32
    %6 = vector.broadcast %cst_5 : f32 to vector<32x8xf32>
    %7 = arith.maximumf %5, %6 : vector<32x8xf32>
    %8 = arith.truncf %7 : vector<32x8xf32> to vector<32x8xbf16>
    %c0_6 = arith.constant 0 : index
    %c0_7 = arith.constant 0 : index
    %9 = vector.load %arg4[%c0_6, %c0_7] : memref<32x8xbf16, #tpu.memory_space<vmem>>, vector<32x8xbf16>
    tpu.vector_store %arg4[%c0_6, %c0_7], %8 {strides = array<i32>} : memref<32x8xbf16, #tpu.memory_space<vmem>>, vector<32x8xbf16>,
    return
  }
  func.func @transform_0(%arg0: i32) -> (i32, i32) {
    %c0_i32 = arith.constant 0 : i32
    %c0_i32_0 = arith.constant 0 : i32
    return %arg0, %c0_i32 : i32, i32
  }
  func.func @transform_1(%arg0: i32) -> (i32, i32) {
    %c0_i32 = arith.constant 0 : i32
    %c0_i32_0 = arith.constant 0 : i32
    %c0_i32_1 = arith.constant 0 : i32
    return %c0_i32, %c0_i32_0 : i32, i32
  }
  func.func @transform_2(%arg0: i32) -> (i32, i32) {
    %c0_i32 = arith.constant 0 : i32
    %c0_i32_0 = arith.constant 0 : i32
    %c0_i32_1 = arith.constant 0 : i32
    return %c0_i32, %c0_i32_0 : i32, i32
  }
  func.func @transform_3(%arg0: i32) -> (i32, i32) {
    %c0_i32 = arith.constant 0 : i32
    %c0_i32_0 = arith.constant 0 : i32
    return %arg0, %c0_i32 : i32, i32
  }
}

module attributes {stable_mosaic.version = 11 : i64} {
  func.func @_mm2_bias_relu_kernel(%arg0: i32, %arg1: memref<32x8xbf16, #tpu.memory_space<vmem>>, %arg2: memref<8x32xbf16, #tpu.memory_space<vmem>>, %arg3: memref<32x16xbf16, #tpu.memory_space<vmem>>, %arg4: memref<16x32xbf16, #tpu.memory_space<vmem>>, %arg5: memref<1x32xf32, #tpu.memory_space<vmem>>, %arg6: memref<32x32xf32, #tpu.memory_space<vmem>>) attributes {dimension_semantics = [#tpu.dimension_semantics<parallel>], iteration_bounds = array<i64: 1>, scalar_prefetch = 0 : i64, scratch_operands = 0 : i64, tpu.core_type = #tpu.core_type<tc>, window_params = [{transform_indices = @transform_0, window_bounds = array<i64: 32, 8>}, {pipeline_mode = #tpu.pipeline_mode<synchronous>, transform_indices = @transform_1, window_bounds = array<i64: 8, 32>}, {transform_indices = @transform_2, window_bounds = array<i64: 32, 16>}, {pipeline_mode = #tpu.pipeline_mode<synchronous>, transform_indices = @transform_3, window_bounds = array<i64: 16, 32>}, {pipeline_mode = #tpu.pipeline_mode<synchronous>, transform_indices = @transform_4, window_bounds = array<i64: 1, 32>}, {transform_indices = @transform_5, window_bounds = array<i64: 32, 32>}]} {
    %c0 = arith.constant 0 : index
    %c0_0 = arith.constant 0 : index
    %0 = vector.load %arg1[%c0, %c0_0] : memref<32x8xbf16, #tpu.memory_space<vmem>>, vector<32x8xbf16>
    %c0_1 = arith.constant 0 : index
    %c0_2 = arith.constant 0 : index
    %1 = vector.load %arg2[%c0_1, %c0_2] : memref<8x32xbf16, #tpu.memory_space<vmem>>, vector<8x32xbf16>
    %cst = arith.constant dense<0.000000e+00> : vector<32x32xf32>
    %2 = tpu.matmul %0, %1, %cst {dimension_numbers = #tpu.dot_dimension_numbers<[1], [0], [0], [1], [0, 0, 1, 1], [], []>} : vector<32x8xbf16>, vector<8x32xbf16>, vector<32x32xf32> -> vector<32x32xf32>
    %c0_3 = arith.constant 0 : index
    %c0_4 = arith.constant 0 : index
    %3 = vector.load %arg3[%c0_3, %c0_4] : memref<32x16xbf16, #tpu.memory_space<vmem>>, vector<32x16xbf16>
    %c0_5 = arith.constant 0 : index
    %c0_6 = arith.constant 0 : index
    %4 = vector.load %arg4[%c0_5, %c0_6] : memref<16x32xbf16, #tpu.memory_space<vmem>>, vector<16x32xbf16>
    %cst_7 = arith.constant dense<0.000000e+00> : vector<32x32xf32>
    %5 = tpu.matmul %3, %4, %cst_7 {dimension_numbers = #tpu.dot_dimension_numbers<[1], [0], [0], [1], [0, 0, 1, 1], [], []>} : vector<32x16xbf16>, vector<16x32xbf16>, vector<32x32xf32> -> vector<32x32xf32>
    %6 = arith.addf %2, %5 : vector<32x32xf32>
    %c0_8 = arith.constant 0 : index
    %c0_9 = arith.constant 0 : index
    %7 = vector.load %arg5[%c0_8, %c0_9] : memref<1x32xf32, #tpu.memory_space<vmem>>, vector<1x32xf32>
    %8 = vector.broadcast %7 : vector<1x32xf32> to vector<32x32xf32>
    %9 = arith.addf %6, %8 : vector<32x32xf32>
    %cst_10 = arith.constant 0.000000e+00 : f32
    %10 = vector.broadcast %cst_10 : f32 to vector<32x32xf32>
    %11 = arith.maximumf %9, %10 : vector<32x32xf32>
    %c0_11 = arith.constant 0 : index
    %c0_12 = arith.constant 0 : index
    %12 = vector.load %arg6[%c0_11, %c0_12] : memref<32x32xf32, #tpu.memory_space<vmem>>, vector<32x32xf32>
    tpu.vector_store %arg6[%c0_11, %c0_12], %11 {strides = array<i32>} : memref<32x32xf32, #tpu.memory_space<vmem>>, vector<32x32xf32>,
    return
  }
  func.func @transform_0(%arg0: i32) -> (i32, i32) {
    %c0_i32 = arith.constant 0 : i32
    %c0_i32_0 = arith.constant 0 : i32
    return %arg0, %c0_i32 : i32, i32
  }
  func.func @transform_1(%arg0: i32) -> (i32, i32) {
    %c0_i32 = arith.constant 0 : i32
    %c0_i32_0 = arith.constant 0 : i32
    %c0_i32_1 = arith.constant 0 : i32
    return %c0_i32, %c0_i32_0 : i32, i32
  }
  func.func @transform_2(%arg0: i32) -> (i32, i32) {
    %c0_i32 = arith.constant 0 : i32
    %c0_i32_0 = arith.constant 0 : i32
    return %arg0, %c0_i32 : i32, i32
  }
  func.func @transform_3(%arg0: i32) -> (i32, i32) {
    %c0_i32 = arith.constant 0 : i32
    %c0_i32_0 = arith.constant 0 : i32
    %c0_i32_1 = arith.constant 0 : i32
    return %c0_i32, %c0_i32_0 : i32, i32
  }
  func.func @transform_4(%arg0: i32) -> (i32, i32) {
    %c0_i32 = arith.constant 0 : i32
    %c0_i32_0 = arith.constant 0 : i32
    %c0_i32_1 = arith.constant 0 : i32
    return %c0_i32, %c0_i32_0 : i32, i32
  }
  func.func @transform_5(%arg0: i32) -> (i32, i32) {
    %c0_i32 = arith.constant 0 : i32
    %c0_i32_0 = arith.constant 0 : i32
    return %arg0, %c0_i32 : i32, i32
  }
}

</mosaic_0001>

<llo_original>
// kernel: mul.21
$region0: #{mul.21}
  %s0 = inlined_call_operand.vmem [shape: f32[8], index: 0, kind: input, shape index: {}]
  %s1 = inlined_call_operand.vmem [shape: f32[2,4], index: 1, kind: output, shape index: {}]
  $region1: #{mul.21} parent=0
    #allocation0 [shape = 'u8[4096]{0}', space=vmem, size = 0x1000, scoped, tag = 'scoped mem for output reshape']
    #allocation1 [shape = 'u8[4096]{0}', space=vmem, size = 0x1000, scoped, tag = 'scoped mem for input reshape']
    %s3 = sshllo.u32 0, 1
    %v4 = vld [vmem:[%s0] sm:%s3]
    %5 = vst [vmem:[#allocation1] sm:%s3] %v4
    %v6 = vld [vmem:[#allocation1] sm:$0x1]
    %vm7 = vcmask 31744
    %8 = vst.msk [vmem:[#allocation0] sm:$0x1] %vm7, %v6
    %v9 = vld [vmem:[#allocation1] sm:$0x1]
    %10 = vrot.lane.b32.xlu0 %v9, 124
    %v11 = vpop.permute.xlu0 %10
    %vm12 = vcmask 31744
    %s13 = scalar_lea.vmem [#allocation0], 1
    %14 = vst.msk [vmem:[%s13] sm:$0x1] %vm12, %v11
    %s16 = sshllo.u32 0, 2
    %v18 = vld [vmem:[#allocation0] sm:%s16]
    %s19 = sshllo.u32 0, 2
    %20 = vst [vmem:[%s1] sm:%s19] %v18

// kernel: bottleneck_forward.3
$region0: #{bottleneck_forward.3}
  #allocation0 [shape = 'u32[]', space=smem, size = 0x4, offset = 0x4, fixed_abs, tag = 'smem constant byte address 0x4 - core index']
  #allocation1 [shape = 'u32[144,128]{1,0:T(1,128)}', space=vmem, size = 0x12000, scoped, tag = 'internal scratch']
  %s0 = inlined_call_operand.vmem [shape: bf16[32,16], index: 0, kind: input, shape index: {}]
  %s1 = inlined_call_operand.vmem [shape: bf16[16,8], index: 1, kind: input, shape index: {}]
  %s2 = inlined_call_operand.vmem [shape: f32[1,8], index: 2, kind: input, shape index: {}]
  %s3 = inlined_call_operand.vmem [shape: bf16[32,8], index: 3, kind: output, shape index: {}]
  %s4 = sld [smem:[#allocation0]]
  $region22: #{bottleneck_forward.3} parent=0
    _
  %s6 = ssub.s32 1, %s4
  %s7 = scalar_select 0, %s6, %s4
  // Predicated region
  $region2: #{bottleneck_forward.3} parent=0 // pred_check
    _
  $region3: #{bottleneck_forward.3} parent=0 // pred_check_branch
    %9 = sbr.rel (0) target = $region5
  $region4: #{bottleneck_forward.3} parent=0 // pred_region
    _
  $region5: #{bottleneck_forward.3} parent=0 // pred_fallthru
    _
  // Predicated region
  $region6: #{bottleneck_forward.3} parent=0 // pred_check
    _
  $region7: #{bottleneck_forward.3} parent=0 // pred_check_branch
    %11 = sbr.rel (0) target = $region9
  $region8: #{bottleneck_forward.3} parent=0 // pred_region
    _
  $region9: #{bottleneck_forward.3} parent=0 // pred_fallthru
    _
  // Predicated region
  $region10: #{bottleneck_forward.3} parent=0 // pred_check
    _
  $region11: #{bottleneck_forward.3} parent=0 // pred_check_branch
    %13 = sbr.rel (0) target = $region13
  $region12: #{bottleneck_forward.3} parent=0 // pred_region
    _
  $region13: #{bottleneck_forward.3} parent=0 // pred_fallthru
    _
  %v15 = vld [vmem:[%s0] sm:$0xf]
  %v16 = vld [vmem:[%s0 + $0x4] sm:$0xf]
  %v17 = vld [vmem:[%s0 + $0x8] sm:$0xf]
  %v18 = vld [vmem:[%s0 + $0xc] sm:$0xf]
  %v19 = vld [vmem:[%s1] sm:$0xf]
  %v20 = vld [vmem:[%s1 + $0x4] sm:$0xf]
  %v21 = vld [vmem:[%s2] sm:$0x1]
  %v23 = vlaneseq
  %v24 = vshrl.u32 %v23, 7
  %v25 = vsub.s32 0, %v24
  %v26 = vrot.slane %v21, %v25
  %v32 = vunpack.c.l.b16 %v15
  %v33 = vunpack.c.l.b16 %v16
  %v34 = vunpack.c.l.b16 %v17
  %v35 = vunpack.c.l.b16 %v18
  %v36 = vpack.c.b16 %v33, %v32
  %v37 = vpack.c.b16 %v35, %v34
  %v40 = vunpack.c.l.b16 %v19
  %v41 = vunpack.c.l.b16 %v20
  %v42 = vpack.c.b16 %v41, %v40
  %vm44 = vcmask 130048
  %v46 = vsel %vm44, %v36, 0
  %v49 = vsel %vm44, %v37, 0
  %51 = vmatprep.subr.bf16.mxu0 0
  %52 = vmatpush1.bf16.msra.mxu0 %v42
  %53 = vmatprep.subr.bf16.mxu0 0
  %54 = vmatpush1.bf16.msra.mxu0 0
  %55 = vmatprep.subr.bf16.mxu0 0
  %56 = vmatpush1.bf16.msra.mxu0 0
  %57 = vmatprep.subr.bf16.mxu0 0
  %58 = vmatpush1.bf16.msra.mxu0 0
  %59 = vmatprep.subr.bf16.mxu0 0
  %60 = vmatpush1.bf16.msra.mxu0 0
  %61 = vmatprep.subr.bf16.mxu0 0
  %62 = vmatpush1.bf16.msra.mxu0 0
  %63 = vmatprep.subr.bf16.mxu0 0
  %64 = vmatpush1.bf16.msra.mxu0 0
  %65 = vmatprep.subr.bf16.mxu0 0
  %66 = vmatpush1.bf16.msra.mxu0 0
  %67 = vmatprep.subr.bf16.mxu0 0
  %68 = vmatpush1.bf16.msra.mxu0 0
  %69 = vmatprep.subr.bf16.mxu0 0
  %70 = vmatpush1.bf16.msra.mxu0 0
  %71 = vmatprep.subr.bf16.mxu0 0
  %72 = vmatpush1.bf16.msra.mxu0 0
  %73 = vmatprep.subr.bf16.mxu0 0
  %74 = vmatpush1.bf16.msra.mxu0 0
  %75 = vmatprep.subr.bf16.mxu0 0
  %76 = vmatpush1.bf16.msra.mxu0 0
  %77 = vmatprep.subr.bf16.mxu0 0
  %78 = vmatpush1.bf16.msra.mxu0 0
  %79 = vmatprep.subr.bf16.mxu0 0
  %80 = vmatpush1.bf16.msra.mxu0 0
  %81 = vmatprep.subr.bf16.mxu0 0
  %82 = vmatpush1.bf16.msra.mxu0 0
  %83 = vmatprep.mubr.bf16.mxu0 0
  %84 = vmatmul.mubr.bf16.gmra.mrb[0].mxu0 %v46
  %v85 = vpop.f32.mrb[0].mxu0
  %v86 = vadd.f32 %v26, %v85
  %v87 = vpop.f32.mrb[0].mxu0
  %v88 = vpop.f32.mrb[0].mxu0
  %v89 = vadd.f32 %v26, %v88
  %v90 = vpop.f32.mrb[0].mxu0
  %91 = vmatprep.mubr.bf16.mxu0 0
  %92 = vmatmul.mubr.bf16.gmra.mrb[0].mxu0 %v49
  %v93 = vpop.f32.mrb[0].mxu0
  %v94 = vadd.f32 %v26, %v93
  %v95 = vpop.f32.mrb[0].mxu0
  %v96 = vpop.f32.mrb[0].mxu0
  %v97 = vadd.f32 %v26, %v96
  %v98 = vpop.f32.mrb[0].mxu0
  %99 = vdwg.mxu0
  %v100 = vmax.f32 %v86, 0.0
  %v101 = vmax.f32 %v89, 0.0
  %v102 = vmax.f32 %v94, 0.0
  %v103 = vmax.f32 %v97, 0.0
  %v104 = vpack.c.bf16 %v101, %v100
  %v105 = vpack.c.bf16 %v103, %v102
  %v108 = vunpack.c.l.b16 %v104
  %v109 = vunpack.c.h.b16 %v104
  %v110 = vunpack.c.l.b16 %v105
  %v111 = vunpack.c.h.b16 %v105
  %v112 = vpack.c.b16 %v108, %v108
  %v113 = vpack.c.b16 %v109, %v109
  %v114 = vpack.c.b16 %v110, %v110
  %v115 = vpack.c.b16 %v111, %v111
  %vm120 = vcmask 60416
  %121 = vst.msk [vmem:[%s3] sm:$0xf] %vm120, %v112
  %122 = vst.msk [vmem:[%s3 + $0x4] sm:$0xf] %vm120, %v113
  %123 = vst.msk [vmem:[%s3 + $0x8] sm:$0xf] %vm120, %v114
  %124 = vst.msk [vmem:[%s3 + $0xc] sm:$0xf] %vm120, %v115
  // Predicated region
  $region14: #{bottleneck_forward.3} parent=0 // pred_check
    _
  $region15: #{bottleneck_forward.3} parent=0 // pred_check_branch
    %126 = sbr.rel (0) target = $region17
  $region16: #{bottleneck_forward.3} parent=0 // pred_region
    _
  $region17: #{bottleneck_forward.3} parent=0 // pred_fallthru
    _
  // Predicated region
  $region18: #{bottleneck_forward.3} parent=0 // pred_check
    _
  $region19: #{bottleneck_forward.3} parent=0 // pred_check_branch
    %128 = sbr.rel (0) target = $region21
  $region20: #{bottleneck_forward.3} parent=0 // pred_region
    _
  $region21: #{bottleneck_forward.3} parent=0 // pred_fallthru
    _

// kernel: bottleneck_forward.4
$region0: #{bottleneck_forward.4}
  #allocation0 [shape = 'u32[]', space=smem, size = 0x4, offset = 0x4, fixed_abs, tag = 'smem constant byte address 0x4 - core index']
  #allocation1 [shape = 'u32[144,128]{1,0:T(1,128)}', space=vmem, size = 0x12000, scoped, tag = 'internal scratch']
  %s0 = inlined_call_operand.vmem [shape: bf16[2,42,8], index: 0, kind: input, shape index: {}]
  %s1 = inlined_call_operand.vmem [shape: bf16[9,8,8], index: 1, kind: input, shape index: {}]
  %s2 = inlined_call_operand.vmem [shape: f32[1,8], index: 2, kind: input, shape index: {}]
  %s3 = inlined_call_operand.vmem [shape: bf16[2,24,8], index: 3, kind: output, shape index: {}]
  %s4 = sld [smem:[#allocation0]]
  $region45: #{bottleneck_forward.4} parent=0
    _
  %s6 = ssub.s32 1, %s4
  %s7 = scalar_select 0, %s6, %s4
  loop: start=0, step=1, limit=4
  $region2: #{bottleneck_forward.4} parent=0 // loop_pre_header
    _
  $region3: #{bottleneck_forward.4} parent=0 // loop_header
    %s9 = sphi 0, %s13
    %p10 = scmp.ge.s32.totalorder %s9, 4
    %s19 = sphi 0, %s21
    %s22 = sphi 0, %s19
    %s23 = sphi 0, %s22
    %s39 = sphi 0, %s23
    %s43 = sphi 0, %s43
    %s45 = sphi 0, %s43
    %s46 = sphi 0, %s45
    %s60 = sphi 0, %s46
    %s64 = sphi 0, %s64
    %s66 = sphi 0, %s64
    %s67 = sphi 0, %s66
    %s81 = sphi 0, %s67
    %s87 = sphi 0, %s89
    %s90 = sphi 0, %s87
    %s91 = sphi 0, %s90
    %s107 = sphi 0, %s91
  $region4: #{bottleneck_forward.4} parent=0 // loop_header_branch
    %12 = sbr.rel (%p10) target = $region8
  $region5: #{bottleneck_forward.4} parent=0 // loop_body
    %s14 = ssub.s32 %s9, 1
    %s15 = ssub.s32 %s9, 2
    %s16 = sadd.s32 %s9, 1
    %s17 = ssub.s32 %s9, %s16
    %p18 = scmp.eq.s32.totalorder %s17, 0
    %s20 = sadd.s32 %s19, 1
    %s21 = scalar_select %p18, %s19, %s20
    %p24 = pneg %p18
    %p25 = scmp.eq.s32.totalorder %s9, 1
    %p26 = por %p24, %p25
    %p27 = scmp.ne.s32.totalorder %s19, %s22
    %p28 = scmp.eq.s32.totalorder %s9, 0
    %p29 = por %p27, %p28
    %p30 = scmp.ne.s32.totalorder %s19, %s22
    %p31 = scmp.eq.s32.totalorder %s14, 1
    %p32 = por %p30, %p31
    %p33 = scmp.ne.s32.totalorder %s22, %s23
    %p34 = scmp.eq.s32.totalorder %s14, 0
    %p35 = por %p33, %p34
    %p36 = scmp.ne.s32.totalorder %s22, %s23
    %p37 = scmp.eq.s32.totalorder %s15, 1
    %p38 = por %p36, %p37
    %p40 = scmp.ne.s32.totalorder %s23, %s39
    %p41 = scmp.eq.s32.totalorder %s15, 0
    %p42 = por %p40, %p41
    %s44 = sadd.s32 %s43, 1
    %p47 = scmp.eq.s32.totalorder %s9, 1
    %p48 = scmp.ne.s32.totalorder %s43, %s45
    %p49 = scmp.eq.s32.totalorder %s9, 0
    %p50 = por %p48, %p49
    %p51 = scmp.ne.s32.totalorder %s43, %s45
    %p52 = scmp.eq.s32.totalorder %s14, 1
    %p53 = por %p51, %p52
    %p54 = scmp.ne.s32.totalorder %s45, %s46
    %p55 = scmp.eq.s32.totalorder %s14, 0
    %p56 = por %p54, %p55
    %p57 = scmp.ne.s32.totalorder %s45, %s46
    %p58 = scmp.eq.s32.totalorder %s15, 1
    %p59 = por %p57, %p58
    %p61 = scmp.ne.s32.totalorder %s46, %s60
    %p62 = scmp.eq.s32.totalorder %s15, 0
    %p63 = por %p61, %p62
    %s65 = sadd.s32 %s64, 1
    %p68 = scmp.eq.s32.totalorder %s9, 1
    %p69 = scmp.ne.s32.totalorder %s64, %s66
    %p70 = scmp.eq.s32.totalorder %s9, 0
    %p71 = por %p69, %p70
    %p72 = scmp.ne.s32.totalorder %s64, %s66
    %p73 = scmp.eq.s32.totalorder %s14, 1
    %p74 = por %p72, %p73
    %p75 = scmp.ne.s32.totalorder %s66, %s67
    %p76 = scmp.eq.s32.totalorder %s14, 0
    %p77 = por %p75, %p76
    %p78 = scmp.ne.s32.totalorder %s66, %s67
    %p79 = scmp.eq.s32.totalorder %s15, 1
    %p80 = por %p78, %p79
    %p82 = scmp.ne.s32.totalorder %s67, %s81
    %p83 = scmp.eq.s32.totalorder %s15, 0
    %p84 = por %p82, %p83
    %s85 = ssub.s32 %s9, %s16
    %p86 = scmp.eq.s32.totalorder %s85, 0
    %s88 = sadd.s32 %s87, 1
    %s89 = scalar_select %p86, %s87, %s88
    %p92 = pneg %p86
    %p93 = scmp.eq.s32.totalorder %s9, 1
    %p94 = por %p92, %p93
    %p95 = scmp.ne.s32.totalorder %s87, %s90
    %p96 = scmp.eq.s32.totalorder %s9, 0
    %p97 = por %p95, %p96
    %p98 = scmp.ne.s32.totalorder %s87, %s90
    %p99 = scmp.eq.s32.totalorder %s14, 1
    %p100 = por %p98, %p99
    %p101 = scmp.ne.s32.totalorder %s90, %s91
    %p102 = scmp.eq.s32.totalorder %s14, 0
    %p103 = por %p101, %p102
    %p104 = scmp.ne.s32.totalorder %s90, %s91
    %p105 = scmp.eq.s32.totalorder %s15, 1
    %p106 = por %p104, %p105
    %p108 = scmp.ne.s32.totalorder %s91, %s107
    %p109 = scmp.eq.s32.totalorder %s15, 0
    %p110 = por %p108, %p109
    %p111 = scmp.le.s32.totalorder 1, %s9
    %p112 = scmp.lt.s32.totalorder %s9, 3
    %p113 = pnand %p111, %p112
    %p114 = pneg %p113
    // Predicated region
    $region9: #{bottleneck_forward.4} parent=5 // pred_check
      _
    $region10: #{bottleneck_forward.4} parent=5 // pred_check_branch
      %116 = sbr.rel (%p113) target = $region12
    $region11: #{bottleneck_forward.4} parent=5 // pred_region
      %s117 = ssub.s32 %s9, 1
      // Predicated region
      $region13: #{bottleneck_forward.4} parent=11 // pred_check
        %p118 = pneg %p56
      $region14: #{bottleneck_forward.4} parent=11 // pred_check_branch
        %120 = sbr.rel (%p118) target = $region16
      $region15: #{bottleneck_forward.4} parent=11 // pred_region
        _
      $region16: #{bottleneck_forward.4} parent=11 // pred_fallthru
        _
      // Predicated region
      $region17: #{bottleneck_forward.4} parent=11 // pred_check
        %p121 = pneg %p77
      $region18: #{bottleneck_forward.4} parent=11 // pred_check_branch
        %123 = sbr.rel (%p121) target = $region20
      $region19: #{bottleneck_forward.4} parent=11 // pred_region
        _
      $region20: #{bottleneck_forward.4} parent=11 // pred_fallthru
        _
    $region12: #{bottleneck_forward.4} parent=5 // pred_fallthru
      _
    %p124 = scmp.lt.s32.totalorder %s9, 2
    // Predicated region
    $region21: #{bottleneck_forward.4} parent=5 // pred_check
      %p125 = pneg %p124
    $region22: #{bottleneck_forward.4} parent=5 // pred_check_branch
      %127 = sbr.rel (%p125) target = $region24
    $region23: #{bottleneck_forward.4} parent=5 // pred_region
      // Predicated region
      $region25: #{bottleneck_forward.4} parent=23 // pred_check
        %p128 = pneg %p29
      $region26: #{bottleneck_forward.4} parent=23 // pred_check_branch
        %130 = sbr.rel (%p128) target = $region28
      $region27: #{bottleneck_forward.4} parent=23 // pred_region
        %p131 = scmp.lt.s32.totalorder %s9, 1
        %s132 = scalar_select %p131, %s9, 1
        %s133 = smul.addr %s132, 6
        %s134 = smul.addr %s133, 4
        %s135 = scalar_lea.vmem %s0, %s134
      $region28: #{bottleneck_forward.4} parent=23 // pred_fallthru
        _
    $region24: #{bottleneck_forward.4} parent=5 // pred_fallthru
      _
    %p136 = scmp.le.s32.totalorder 1, %s9
    %p137 = scmp.lt.s32.totalorder %s9, 3
    %p138 = pnand %p136, %p137
    %p139 = pneg %p138
    // Predicated region
    $region29: #{bottleneck_forward.4} parent=5 // pred_check
      _
    $region30: #{bottleneck_forward.4} parent=5 // pred_check_branch
      %141 = sbr.rel (%p138) target = $region32
    $region31: #{bottleneck_forward.4} parent=5 // pred_region
      %s142 = ssub.s32 %s9, 1
      %p143 = scmp.lt.s32.totalorder %s14, 1
      %s144 = scalar_select %p143, %s14, 1
      %s145 = smul.addr %s144, 6
      %s146 = smul.addr %s145, 4
      %s147 = scalar_lea.vmem %s0, %s146
      %p148 = pneg %p35
      %p149 = pneg %p32
      %p150 = pneg %p56
      %p151 = pneg %p53
      %p152 = pneg %p77
      %p153 = pneg %p74
      %p154 = pneg %p103
      %p155 = pneg %p100
      %p156 = scmp.lt.s32.totalorder %s14, 1
      %s157 = scalar_select %p156, %s14, 1
      %s158 = smul.addr %s157, 3
      %s159 = smul.addr %s158, 4
      %s160 = scalar_lea.vmem %s3, %s159
      %p161 = scmp.lt.s32.totalorder %s14, 1
      %s162 = scalar_select %p161, %s14, 1
      %s163 = smul.addr %s162, 6
      %s164 = smul.addr %s163, 4
      %s165 = scalar_lea.vmem %s0, %s164
      %p166 = scmp.lt.s32.totalorder %s14, 1
      %s167 = scalar_select %p166, %s14, 1
      %s168 = smul.addr %s167, 3
      %s169 = smul.addr %s168, 4
      %s170 = scalar_lea.vmem %s3, %s169
      %v172 = vld [vmem:[%s165] sm:$0xf]
      %v173 = vld [vmem:[%s165 + $0x4] sm:$0xf]
      %v174 = vld [vmem:[%s165 + $0x8] sm:$0xf]
      %v175 = vld [vmem:[%s1] sm:$0xf]
      %v176 = vld [vmem:[%s165 + $0xc] sm:$0x1]
      %s177 = scalar_lea.vmem %s1, 4
      %v178 = vld [vmem:[%s177] sm:$0xf]
      %v183 = vunpack.c.l.b16 %v172
      %v184 = vunpack.c.l.b16 %v173
      %v185 = vunpack.c.l.b16 %v174
      %v186 = vunpack.c.l.b16 %v176
      %v187 = vpack.c.b16 %v184, %v183
      %v188 = vpack.c.b16 %v186, %v185
      %vm189 = vsmask.f32 7424
      %v191 = vshrl.u32 %v187, 16
      %v193 = vshll.u32 %v187, 16
      %v195 = vrot.slane %v193, 1
      %v196 = vor.u32 %v191, %v195
      %v198 = vshll.u32 %v188, 16
      %v200 = vrot.slane %v198, 1
      %v201 = vsel %vm189, %v196, %v200
      %v202 = vshrl.u32 %v188, 16
      %v204 = vor.u32 %v202, %v200
      %vm205 = vcmask 64512
      %v207 = vsel %vm205, %v201, 0
      %v210 = vsel %vm205, %v204, 0
      %vm212 = vcmask 1043456
      %v214 = vsel %vm212, %v178, 0
      %216 = vmatprep.subr.bf16.mxu0 0
      %217 = vmatpush1.bf16.msra.mxu0 %v214
      %218 = vmatprep.subr.bf16.mxu0 0
      %219 = vmatpush1.bf16.msra.mxu0 0
      %220 = vmatprep.subr.bf16.mxu0 0
      %221 = vmatpush1.bf16.msra.mxu0 0
      %222 = vmatprep.subr.bf16.mxu0 0
      %223 = vmatpush1.bf16.msra.mxu0 0
      %224 = vmatprep.subr.bf16.mxu0 0
      %225 = vmatpush1.bf16.msra.mxu0 0
      %226 = vmatprep.subr.bf16.mxu0 0
      %227 = vmatpush1.bf16.msra.mxu0 0
      %228 = vmatprep.subr.bf16.mxu0 0
      %229 = vmatpush1.bf16.msra.mxu0 0
      %230 = vmatprep.subr.bf16.mxu0 0
      %231 = vmatpush1.bf16.msra.mxu0 0
      %232 = vmatprep.subr.bf16.mxu0 0
      %233 = vmatpush1.bf16.msra.mxu0 0
      %234 = vmatprep.subr.bf16.mxu0 0
      %235 = vmatpush1.bf16.msra.mxu0 0
      %236 = vmatprep.subr.bf16.mxu0 0
      %237 = vmatpush1.bf16.msra.mxu0 0
      %238 = vmatprep.subr.bf16.mxu0 0
      %239 = vmatpush1.bf16.msra.mxu0 0
      %240 = vmatprep.subr.bf16.mxu0 0
      %241 = vmatpush1.bf16.msra.mxu0 0
      %242 = vmatprep.subr.bf16.mxu0 0
      %243 = vmatpush1.bf16.msra.mxu0 0
      %244 = vmatprep.subr.bf16.mxu0 0
      %245 = vmatpush1.bf16.msra.mxu0 0
      %246 = vmatprep.subr.bf16.mxu0 0
      %247 = vmatpush1.bf16.msra.mxu0 0
      %248 = vmatprep.mubr.bf16.mxu0 0
      %249 = vmatmul.mubr.bf16.gmra.mrb[0].mxu0 %v207
      %v250 = vpop.f32.mrb[0].mxu0
      %v251 = vadd.f32 0.0, %v250
      %v252 = vpop.f32.mrb[0].mxu0
      %v253 = vpop.f32.mrb[0].mxu0
      %v254 = vadd.f32 0.0, %v253
      %v255 = vpop.f32.mrb[0].mxu0
      %256 = vmatprep.mubr.bf16.mxu0 0
      %257 = vmatmul.mubr.bf16.gmra.mrb[0].mxu0 %v210
      %v258 = vpop.f32.mrb[0].mxu0
      %v259 = vadd.f32 0.0, %v258
      %v260 = vpop.f32.mrb[0].mxu0
      %v261 = vpop.f32.mrb[0].mxu0
      %v262 = vpop.f32.mrb[0].mxu0
      %263 = vdwg.mxu0
      %v264 = vpack.c.b16 %v185, %v185
      %v265 = vsel %vm205, %v187, 0
      %v268 = vsel %vm205, %v264, 0
      %v271 = vsel %vm212, %v175, 0
      %273 = vmatprep.subr.bf16.mxu0 0
      %274 = vmatpush1.bf16.msra.mxu0 %v271
      %275 = vmatprep.subr.bf16.mxu0 0
      %276 = vmatpush1.bf16.msra.mxu0 0
      %277 = vmatprep.subr.bf16.mxu0 0
      %278 = vmatpush1.bf16.msra.mxu0 0
      %279 = vmatprep.subr.bf16.mxu0 0
      %280 = vmatpush1.bf16.msra.mxu0 0
      %281 = vmatprep.subr.bf16.mxu0 0
      %282 = vmatpush1.bf16.msra.mxu0 0
      %283 = vmatprep.subr.bf16.mxu0 0
      %284 = vmatpush1.bf16.msra.mxu0 0
      %285 = vmatprep.subr.bf16.mxu0 0
      %286 = vmatpush1.bf16.msra.mxu0 0
      %287 = vmatprep.subr.bf16.mxu0 0
      %288 = vmatpush1.bf16.msra.mxu0 0
      %289 = vmatprep.subr.bf16.mxu0 0
      %290 = vmatpush1.bf16.msra.mxu0 0
      %291 = vmatprep.subr.bf16.mxu0 0
      %292 = vmatpush1.bf16.msra.mxu0 0
      %293 = vmatprep.subr.bf16.mxu0 0
      %294 = vmatpush1.bf16.msra.mxu0 0
      %295 = vmatprep.subr.bf16.mxu0 0
      %296 = vmatpush1.bf16.msra.mxu0 0
      %297 = vmatprep.subr.bf16.mxu0 0
      %298 = vmatpush1.bf16.msra.mxu0 0
      %299 = vmatprep.subr.bf16.mxu0 0
      %300 = vmatpush1.bf16.msra.mxu0 0
      %301 = vmatprep.subr.bf16.mxu0 0
      %302 = vmatpush1.bf16.msra.mxu0 0
      %303 = vmatprep.subr.bf16.mxu0 0
      %304 = vmatpush1.bf16.msra.mxu0 0
      %305 = vmatprep.mubr.bf16.mxu0 0
      %306 = vmatmul.mubr.bf16.gmra.mrb[0].mxu0 %v265
      %v307 = vpop.f32.mrb[0].mxu0
      %v308 = vadd.f32 %v251, %v307
      %v309 = vpop.f32.mrb[0].mxu0
      %v310 = vpop.f32.mrb[0].mxu0
      %v311 = vadd.f32 %v254, %v310
      %v312 = vpop.f32.mrb[0].mxu0
      %313 = vmatprep.mubr.bf16.mxu0 0
      %314 = vmatmul.mubr.bf16.gmra.mrb[0].mxu0 %v268
      %v315 = vpop.f32.mrb[0].mxu0
      %v316 = vadd.f32 %v259, %v315
      %v317 = vpop.f32.mrb[0].mxu0
      %v318 = vpop.f32.mrb[0].mxu0
      %v319 = vpop.f32.mrb[0].mxu0
      %320 = vdwg.mxu0
      %v321 = vld [vmem:[%s165] sm:$0xe]
      %s322 = scalar_lea.vmem %s1, 8
      %v323 = vld [vmem:[%s322] sm:$0xf]
      %v325 = vunpack.c.l.b16 %v321
      %v326 = vpack.c.b16 %v184, %v325
      %vm327 = vcmask 1046528
      %v328 = vrot.slane %v326, 1
      %v329 = vrot.slane %v188, 1
      %v330 = vsel %vm327, %v328, %v329
      %v332 = vsel %vm205, %v330, 0
      %v335 = vsel %vm205, %v329, 0
      %v338 = vsel %vm212, %v323, 0
      %340 = vmatprep.subr.bf16.mxu0 0
      %341 = vmatpush1.bf16.msra.mxu0 %v338
      %342 = vmatprep.subr.bf16.mxu0 0
      %343 = vmatpush1.bf16.msra.mxu0 0
      %344 = vmatprep.subr.bf16.mxu0 0
      %345 = vmatpush1.bf16.msra.mxu0 0
      %346 = vmatprep.subr.bf16.mxu0 0
      %347 = vmatpush1.bf16.msra.mxu0 0
      %348 = vmatprep.subr.bf16.mxu0 0
      %349 = vmatpush1.bf16.msra.mxu0 0
      %350 = vmatprep.subr.bf16.mxu0 0
      %351 = vmatpush1.bf16.msra.mxu0 0
      %352 = vmatprep.subr.bf16.mxu0 0
      %353 = vmatpush1.bf16.msra.mxu0 0
      %354 = vmatprep.subr.bf16.mxu0 0
      %355 = vmatpush1.bf16.msra.mxu0 0
      %356 = vmatprep.subr.bf16.mxu0 0
      %357 = vmatpush1.bf16.msra.mxu0 0
      %358 = vmatprep.subr.bf16.mxu0 0
      %359 = vmatpush1.bf16.msra.mxu0 0
      %360 = vmatprep.subr.bf16.mxu0 0
      %361 = vmatpush1.bf16.msra.mxu0 0
      %362 = vmatprep.subr.bf16.mxu0 0
      %363 = vmatpush1.bf16.msra.mxu0 0
      %364 = vmatprep.subr.bf16.mxu0 0
      %365 = vmatpush1.bf16.msra.mxu0 0
      %366 = vmatprep.subr.bf16.mxu0 0
      %367 = vmatpush1.bf16.msra.mxu0 0
      %368 = vmatprep.subr.bf16.mxu0 0
      %369 = vmatpush1.bf16.msra.mxu0 0
      %370 = vmatprep.subr.bf16.mxu0 0
      %371 = vmatpush1.bf16.msra.mxu0 0
      %372 = vmatprep.mubr.bf16.mxu0 0
      %373 = vmatmul.mubr.bf16.gmra.mrb[0].mxu0 %v332
      %v374 = vpop.f32.mrb[0].mxu0
      %v375 = vadd.f32 0.0, %v374
      %v376 = vpop.f32.mrb[0].mxu0
      %v377 = vpop.f32.mrb[0].mxu0
      %v378 = vadd.f32 0.0, %v377
      %v379 = vpop.f32.mrb[0].mxu0
      %380 = vmatprep.mubr.bf16.mxu0 0
      %381 = vmatmul.mubr.bf16.gmra.mrb[0].mxu0 %v335
      %v382 = vpop.f32.mrb[0].mxu0
      %v383 = vadd.f32 0.0, %v382
      %v384 = vpop.f32.mrb[0].mxu0
      %v385 = vpop.f32.mrb[0].mxu0
      %v386 = vpop.f32.mrb[0].mxu0
      %387 = vdwg.mxu0
      %v388 = vadd.f32 %v308, %v375
      %v389 = vadd.f32 %v311, %v378
      %v390 = vadd.f32 %v316, %v383
      %v391 = vld [vmem:[%s165] sm:$0x8]
      %v392 = vld [vmem:[%s165 + $0xc] sm:$0x7]
      %s393 = scalar_lea.vmem %s1, 12
      %v394 = vld [vmem:[%s393] sm:$0xf]
      %v397 = vunpack.c.l.b16 %v391
      %v398 = vunpack.c.l.b16 %v392
      %v399 = vpack.c.b16 %v184, %v397
      %v400 = vpack.c.b16 %v398, %v185
      %vm401 = vcmask 1044480
      %v402 = vrot.slane %v399, 3
      %v403 = vrot.slane %v400, 3
      %v404 = vsel %vm401, %v402, %v403
      %v406 = vsel %vm205, %v404, 0
      %v409 = vsel %vm205, %v403, 0
      %v412 = vsel %vm212, %v394, 0
      %414 = vmatprep.subr.bf16.mxu0 0
      %415 = vmatpush1.bf16.msra.mxu0 %v412
      %416 = vmatprep.subr.bf16.mxu0 0
      %417 = vmatpush1.bf16.msra.mxu0 0
      %418 = vmatprep.subr.bf16.mxu0 0
      %419 = vmatpush1.bf16.msra.mxu0 0
      %420 = vmatprep.subr.bf16.mxu0 0
      %421 = vmatpush1.bf16.msra.mxu0 0
      %422 = vmatprep.subr.bf16.mxu0 0
      %423 = vmatpush1.bf16.msra.mxu0 0
      %424 = vmatprep.subr.bf16.mxu0 0
      %425 = vmatpush1.bf16.msra.mxu0 0
      %426 = vmatprep.subr.bf16.mxu0 0
      %427 = vmatpush1.bf16.msra.mxu0 0
      %428 = vmatprep.subr.bf16.mxu0 0
      %429 = vmatpush1.bf16.msra.mxu0 0
      %430 = vmatprep.subr.bf16.mxu0 0
      %431 = vmatpush1.bf16.msra.mxu0 0
      %432 = vmatprep.subr.bf16.mxu0 0
      %433 = vmatpush1.bf16.msra.mxu0 0
      %434 = vmatprep.subr.bf16.mxu0 0
      %435 = vmatpush1.bf16.msra.mxu0 0
      %436 = vmatprep.subr.bf16.mxu0 0
      %437 = vmatpush1.bf16.msra.mxu0 0
      %438 = vmatprep.subr.bf16.mxu0 0
      %439 = vmatpush1.bf16.msra.mxu0 0
      %440 = vmatprep.subr.bf16.mxu0 0
      %441 = vmatpush1.bf16.msra.mxu0 0
      %442 = vmatprep.subr.bf16.mxu0 0
      %443 = vmatpush1.bf16.msra.mxu0 0
      %444 = vmatprep.subr.bf16.mxu0 0
      %445 = vmatpush1.bf16.msra.mxu0 0
      %446 = vmatprep.mubr.bf16.mxu0 0
      %447 = vmatmul.mubr.bf16.gmra.mrb[0].mxu0 %v406
      %v448 = vpop.f32.mrb[0].mxu0
      %v449 = vadd.f32 0.0, %v448
      %v450 = vpop.f32.mrb[0].mxu0
      %v451 = vpop.f32.mrb[0].mxu0
      %v452 = vadd.f32 0.0, %v451
      %v453 = vpop.f32.mrb[0].mxu0
      %454 = vmatprep.mubr.bf16.mxu0 0
      %455 = vmatmul.mubr.bf16.gmra.mrb[0].mxu0 %v409
      %v456 = vpop.f32.mrb[0].mxu0
      %v457 = vadd.f32 0.0, %v456
      %v458 = vpop.f32.mrb[0].mxu0
      %v459 = vpop.f32.mrb[0].mxu0
      %v460 = vpop.f32.mrb[0].mxu0
      %461 = vdwg.mxu0
      %v462 = vadd.f32 %v388, %v449
      %v463 = vadd.f32 %v389, %v452
      %v464 = vadd.f32 %v390, %v457
      %v465 = vld [vmem:[%s165 + $0xc] sm:$0xf]
      %s466 = scalar_lea.vmem %s1, 16
      %v467 = vld [vmem:[%s466] sm:$0xf]
      %v469 = vunpack.c.l.b16 %v465
      %v470 = vpack.c.b16 %v469, %v185
      %vm471 = vsmask.f32 4352
      %v473 = vshrl.u32 %v399, 16
      %v475 = vrot.slane %v473, 3
      %v476 = vshll.u32 %v399, 16
      %v478 = vrot.slane %v476, 4
      %v479 = vor.u32 %v475, %v478
      %v481 = vshrl.u32 %v470, 16
      %v483 = vrot.slane %v481, 3
      %v484 = vshll.u32 %v470, 16
      %v486 = vrot.slane %v484, 4
      %v487 = vor.u32 %v483, %v486
      %v488 = vsel %vm471, %v479, %v487
      %v490 = vsel %vm205, %v488, 0
      %v493 = vsel %vm205, %v487, 0
      %v496 = vsel %vm212, %v467, 0
      %498 = vmatprep.subr.bf16.mxu0 0
      %499 = vmatpush1.bf16.msra.mxu0 %v496
      %500 = vmatprep.subr.bf16.mxu0 0
      %501 = vmatpush1.bf16.msra.mxu0 0
      %502 = vmatprep.subr.bf16.mxu0 0
      %503 = vmatpush1.bf16.msra.mxu0 0
      %504 = vmatprep.subr.bf16.mxu0 0
      %505 = vmatpush1.bf16.msra.mxu0 0
      %506 = vmatprep.subr.bf16.mxu0 0
      %507 = vmatpush1.bf16.msra.mxu0 0
      %508 = vmatprep.subr.bf16.mxu0 0
      %509 = vmatpush1.bf16.msra.mxu0 0
      %510 = vmatprep.subr.bf16.mxu0 0
      %511 = vmatpush1.bf16.msra.mxu0 0
      %512 = vmatprep.subr.bf16.mxu0 0
      %513 = vmatpush1.bf16.msra.mxu0 0
      %514 = vmatprep.subr.bf16.mxu0 0
      %515 = vmatpush1.bf16.msra.mxu0 0
      %516 = vmatprep.subr.bf16.mxu0 0
      %517 = vmatpush1.bf16.msra.mxu0 0
      %518 = vmatprep.subr.bf16.mxu0 0
      %519 = vmatpush1.bf16.msra.mxu0 0
      %520 = vmatprep.subr.bf16.mxu0 0
      %521 = vmatpush1.bf16.msra.mxu0 0
      %522 = vmatprep.subr.bf16.mxu0 0
      %523 = vmatpush1.bf16.msra.mxu0 0
      %524 = vmatprep.subr.bf16.mxu0 0
      %525 = vmatpush1.bf16.msra.mxu0 0
      %526 = vmatprep.subr.bf16.mxu0 0
      %527 = vmatpush1.bf16.msra.mxu0 0
      %528 = vmatprep.subr.bf16.mxu0 0
      %529 = vmatpush1.bf16.msra.mxu0 0
      %530 = vmatprep.mubr.bf16.mxu0 0
      %531 = vmatmul.mubr.bf16.gmra.mrb[0].mxu0 %v490
      %v532 = vpop.f32.mrb[0].mxu0
      %v533 = vadd.f32 0.0, %v532
      %v534 = vpop.f32.mrb[0].mxu0
      %v535 = vpop.f32.mrb[0].mxu0
      %v536 = vadd.f32 0.0, %v535
      %v537 = vpop.f32.mrb[0].mxu0
      %538 = vmatprep.mubr.bf16.mxu0 0
      %539 = vmatmul.mubr.bf16.gmra.mrb[0].mxu0 %v493
      %v540 = vpop.f32.mrb[0].mxu0
      %v541 = vadd.f32 0.0, %v540
      %v542 = vpop.f32.mrb[0].mxu0
      %v543 = vpop.f32.mrb[0].mxu0
      %v544 = vpop.f32.mrb[0].mxu0
      %545 = vdwg.mxu0
      %v546 = vadd.f32 %v462, %v533
      %v547 = vadd.f32 %v463, %v536
      %v548 = vadd.f32 %v464, %v541
      %s549 = scalar_lea.vmem %s1, 20
      %v550 = vld [vmem:[%s549] sm:$0xf]
      %v551 = vpack.c.b16 %v185, %v184
      %v552 = vpack.c.b16 %v469, %v469
      %v554 = vsel %vm205, %v551, 0
      %v557 = vsel %vm205, %v552, 0
      %v560 = vsel %vm212, %v550, 0
      %562 = vmatprep.subr.bf16.mxu0 0
      %563 = vmatpush1.bf16.msra.mxu0 %v560
      %564 = vmatprep.subr.bf16.mxu0 0
      %565 = vmatpush1.bf16.msra.mxu0 0
      %566 = vmatprep.subr.bf16.mxu0 0
      %567 = vmatpush1.bf16.msra.mxu0 0
      %568 = vmatprep.subr.bf16.mxu0 0
      %569 = vmatpush1.bf16.msra.mxu0 0
      %570 = vmatprep.subr.bf16.mxu0 0
      %571 = vmatpush1.bf16.msra.mxu0 0
      %572 = vmatprep.subr.bf16.mxu0 0
      %573 = vmatpush1.bf16.msra.mxu0 0
      %574 = vmatprep.subr.bf16.mxu0 0
      %575 = vmatpush1.bf16.msra.mxu0 0
      %576 = vmatprep.subr.bf16.mxu0 0
      %577 = vmatpush1.bf16.msra.mxu0 0
      %578 = vmatprep.subr.bf16.mxu0 0
      %579 = vmatpush1.bf16.msra.mxu0 0
      %580 = vmatprep.subr.bf16.mxu0 0
      %581 = vmatpush1.bf16.msra.mxu0 0
      %582 = vmatprep.subr.bf16.mxu0 0
      %583 = vmatpush1.bf16.msra.mxu0 0
      %584 = vmatprep.subr.bf16.mxu0 0
      %585 = vmatpush1.bf16.msra.mxu0 0
      %586 = vmatprep.subr.bf16.mxu0 0
      %587 = vmatpush1.bf16.msra.mxu0 0
      %588 = vmatprep.subr.bf16.mxu0 0
      %589 = vmatpush1.bf16.msra.mxu0 0
      %590 = vmatprep.subr.bf16.mxu0 0
      %591 = vmatpush1.bf16.msra.mxu0 0
      %592 = vmatprep.subr.bf16.mxu0 0
      %593 = vmatpush1.bf16.msra.mxu0 0
      %594 = vmatprep.mubr.bf16.mxu0 0
      %595 = vmatmul.mubr.bf16.gmra.mrb[0].mxu0 %v554
      %v596 = vpop.f32.mrb[0].mxu0
      %v597 = vadd.f32 0.0, %v596
      %v598 = vpop.f32.mrb[0].mxu0
      %v599 = vpop.f32.mrb[0].mxu0
      %v600 = vadd.f32 0.0, %v599
      %v601 = vpop.f32.mrb[0].mxu0
      %602 = vmatprep.mubr.bf16.mxu0 0
      %603 = vmatmul.mubr.bf16.gmra.mrb[0].mxu0 %v557
      %v604 = vpop.f32.mrb[0].mxu0
      %v605 = vadd.f32 0.0, %v604
      %v606 = vpop.f32.mrb[0].mxu0
      %v607 = vpop.f32.mrb[0].mxu0
      %v608 = vpop.f32.mrb[0].mxu0
      %609 = vdwg.mxu0
      %v610 = vadd.f32 %v546, %v597
      %v611 = vadd.f32 %v547, %v600
      %v612 = vadd.f32 %v548, %v605
      %v613 = vld [vmem:[%s165 + $0x4] sm:$0xc]
      %v614 = vld [vmem:[%s165 + $0x8] sm:$0xf]
      %v615 = vld [vmem:[%s165 + $0xc] sm:$0xf]
      %v616 = vld [vmem:[%s165 + $0x10] sm:$0x3]
      %s617 = scalar_lea.vmem %s1, 24
      %v618 = vld [vmem:[%s617] sm:$0xf]
      %v623 = vunpack.c.l.b16 %v613
      %v624 = vunpack.c.l.b16 %v614
      %v625 = vunpack.c.l.b16 %v615
      %v626 = vunpack.c.l.b16 %v616
      %v627 = vpack.c.b16 %v624, %v623
      %v628 = vpack.c.b16 %v626, %v625
      %vm629 = vcmask 1045504
      %v630 = vrot.slane %v627, 2
      %v631 = vrot.slane %v628, 2
      %v632 = vsel %vm629, %v630, %v631
      %v634 = vsel %vm205, %v632, 0
      %v637 = vsel %vm205, %v631, 0
      %v640 = vsel %vm212, %v618, 0
      %642 = vmatprep.subr.bf16.mxu0 0
      %643 = vmatpush1.bf16.msra.mxu0 %v640
      %644 = vmatprep.subr.bf16.mxu0 0
      %645 = vmatpush1.bf16.msra.mxu0 0
      %646 = vmatprep.subr.bf16.mxu0 0
      %647 = vmatpush1.bf16.msra.mxu0 0
      %648 = vmatprep.subr.bf16.mxu0 0
      %649 = vmatpush1.bf16.msra.mxu0 0
      %650 = vmatprep.subr.bf16.mxu0 0
      %651 = vmatpush1.bf16.msra.mxu0 0
      %652 = vmatprep.subr.bf16.mxu0 0
      %653 = vmatpush1.bf16.msra.mxu0 0
      %654 = vmatprep.subr.bf16.mxu0 0
      %655 = vmatpush1.bf16.msra.mxu0 0
      %656 = vmatprep.subr.bf16.mxu0 0
      %657 = vmatpush1.bf16.msra.mxu0 0
      %658 = vmatprep.subr.bf16.mxu0 0
      %659 = vmatpush1.bf16.msra.mxu0 0
      %660 = vmatprep.subr.bf16.mxu0 0
      %661 = vmatpush1.bf16.msra.mxu0 0
      %662 = vmatprep.subr.bf16.mxu0 0
      %663 = vmatpush1.bf16.msra.mxu0 0
      %664 = vmatprep.subr.bf16.mxu0 0
      %665 = vmatpush1.bf16.msra.mxu0 0
      %666 = vmatprep.subr.bf16.mxu0 0
      %667 = vmatpush1.bf16.msra.mxu0 0
      %668 = vmatprep.subr.bf16.mxu0 0
      %669 = vmatpush1.bf16.msra.mxu0 0
      %670 = vmatprep.subr.bf16.mxu0 0
      %671 = vmatpush1.bf16.msra.mxu0 0
      %672 = vmatprep.subr.bf16.mxu0 0
      %673 = vmatpush1.bf16.msra.mxu0 0
      %674 = vmatprep.mubr.bf16.mxu0 0
      %675 = vmatmul.mubr.bf16.gmra.mrb[0].mxu0 %v634
      %v676 = vpop.f32.mrb[0].mxu0
      %v677 = vadd.f32 0.0, %v676
      %v678 = vpop.f32.mrb[0].mxu0
      %v679 = vpop.f32.mrb[0].mxu0
      %v680 = vadd.f32 0.0, %v679
      %v681 = vpop.f32.mrb[0].mxu0
      %682 = vmatprep.mubr.bf16.mxu0 0
      %683 = vmatmul.mubr.bf16.gmra.mrb[0].mxu0 %v637
      %v684 = vpop.f32.mrb[0].mxu0
      %v685 = vadd.f32 0.0, %v684
      %v686 = vpop.f32.mrb[0].mxu0
      %v687 = vpop.f32.mrb[0].mxu0
      %v688 = vpop.f32.mrb[0].mxu0
      %689 = vdwg.mxu0
      %v690 = vadd.f32 %v610, %v677
      %v691 = vadd.f32 %v611, %v680
      %v692 = vadd.f32 %v612, %v685
      %v693 = vld [vmem:[%s165 + $0x10] sm:$0x7]
      %s694 = scalar_lea.vmem %s1, 28
      %v695 = vld [vmem:[%s694] sm:$0xf]
      %v697 = vunpack.c.l.b16 %v693
      %v698 = vpack.c.b16 %v697, %v625
      %vm699 = vsmask.f32 5376
      %v701 = vshrl.u32 %v627, 16
      %v703 = vrot.slane %v701, 2
      %v704 = vshll.u32 %v627, 16
      %v706 = vrot.slane %v704, 3
      %v707 = vor.u32 %v703, %v706
      %v709 = vshrl.u32 %v698, 16
      %v711 = vrot.slane %v709, 2
      %v712 = vshll.u32 %v698, 16
      %v714 = vrot.slane %v712, 3
      %v715 = vor.u32 %v711, %v714
      %v716 = vsel %vm699, %v707, %v715
      %v718 = vsel %vm205, %v716, 0
      %v721 = vsel %vm205, %v715, 0
      %v724 = vsel %vm212, %v695, 0
      %726 = vmatprep.subr.bf16.mxu0 0
      %727 = vmatpush1.bf16.msra.mxu0 %v724
      %728 = vmatprep.subr.bf16.mxu0 0
      %729 = vmatpush1.bf16.msra.mxu0 0
      %730 = vmatprep.subr.bf16.mxu0 0
      %731 = vmatpush1.bf16.msra.mxu0 0
      %732 = vmatprep.subr.bf16.mxu0 0
      %733 = vmatpush1.bf16.msra.mxu0 0
      %734 = vmatprep.subr.bf16.mxu0 0
      %735 = vmatpush1.bf16.msra.mxu0 0
      %736 = vmatprep.subr.bf16.mxu0 0
      %737 = vmatpush1.bf16.msra.mxu0 0
      %738 = vmatprep.subr.bf16.mxu0 0
      %739 = vmatpush1.bf16.msra.mxu0 0
      %740 = vmatprep.subr.bf16.mxu0 0
      %741 = vmatpush1.bf16.msra.mxu0 0
      %742 = vmatprep.subr.bf16.mxu0 0
      %743 = vmatpush1.bf16.msra.mxu0 0
      %744 = vmatprep.subr.bf16.mxu0 0
      %745 = vmatpush1.bf16.msra.mxu0 0
      %746 = vmatprep.subr.bf16.mxu0 0
      %747 = vmatpush1.bf16.msra.mxu0 0
      %748 = vmatprep.subr.bf16.mxu0 0
      %749 = vmatpush1.bf16.msra.mxu0 0
      %750 = vmatprep.subr.bf16.mxu0 0
      %751 = vmatpush1.bf16.msra.mxu0 0
      %752 = vmatprep.subr.bf16.mxu0 0
      %753 = vmatpush1.bf16.msra.mxu0 0
      %754 = vmatprep.subr.bf16.mxu0 0
      %755 = vmatpush1.bf16.msra.mxu0 0
      %756 = vmatprep.subr.bf16.mxu0 0
      %757 = vmatpush1.bf16.msra.mxu0 0
      %758 = vmatprep.mubr.bf16.mxu0 0
      %759 = vmatmul.mubr.bf16.gmra.mrb[0].mxu0 %v718
      %v760 = vpop.f32.mrb[0].mxu0
      %v761 = vadd.f32 0.0, %v760
      %v762 = vpop.f32.mrb[0].mxu0
      %v763 = vpop.f32.mrb[0].mxu0
      %v764 = vadd.f32 0.0, %v763
      %v765 = vpop.f32.mrb[0].mxu0
      %766 = vmatprep.mubr.bf16.mxu0 0
      %767 = vmatmul.mubr.bf16.gmra.mrb[0].mxu0 %v721
      %v768 = vpop.f32.mrb[0].mxu0
      %v769 = vadd.f32 0.0, %v768
      %v770 = vpop.f32.mrb[0].mxu0
      %v771 = vpop.f32.mrb[0].mxu0
      %v772 = vpop.f32.mrb[0].mxu0
      %773 = vdwg.mxu0
      %v774 = vadd.f32 %v690, %v761
      %v775 = vadd.f32 %v691, %v764
      %v776 = vadd.f32 %v692, %v769
      %v777 = vld [vmem:[%s165 + $0x4] sm:$0x8]
      %s778 = scalar_lea.vmem %s1, 32
      %v779 = vld [vmem:[%s778] sm:$0xf]
      %v781 = vunpack.c.l.b16 %v777
      %v782 = vpack.c.b16 %v624, %v781
      %v783 = vrot.slane %v782, 3
      %v784 = vrot.slane %v698, 3
      %v785 = vsel %vm401, %v783, %v784
      %v787 = vsel %vm205, %v785, 0
      %v790 = vsel %vm205, %v784, 0
      %v793 = vsel %vm212, %v779, 0
      %795 = vmatprep.subr.bf16.mxu0 0
      %796 = vmatpush1.bf16.msra.mxu0 %v793
      %797 = vmatprep.subr.bf16.mxu0 0
      %798 = vmatpush1.bf16.msra.mxu0 0
      %799 = vmatprep.subr.bf16.mxu0 0
      %800 = vmatpush1.bf16.msra.mxu0 0
      %801 = vmatprep.subr.bf16.mxu0 0
      %802 = vmatpush1.bf16.msra.mxu0 0
      %803 = vmatprep.subr.bf16.mxu0 0
      %804 = vmatpush1.bf16.msra.mxu0 0
      %805 = vmatprep.subr.bf16.mxu0 0
      %806 = vmatpush1.bf16.msra.mxu0 0
      %807 = vmatprep.subr.bf16.mxu0 0
      %808 = vmatpush1.bf16.msra.mxu0 0
      %809 = vmatprep.subr.bf16.mxu0 0
      %810 = vmatpush1.bf16.msra.mxu0 0
      %811 = vmatprep.subr.bf16.mxu0 0
      %812 = vmatpush1.bf16.msra.mxu0 0
      %813 = vmatprep.subr.bf16.mxu0 0
      %814 = vmatpush1.bf16.msra.mxu0 0
      %815 = vmatprep.subr.bf16.mxu0 0
      %816 = vmatpush1.bf16.msra.mxu0 0
      %817 = vmatprep.subr.bf16.mxu0 0
      %818 = vmatpush1.bf16.msra.mxu0 0
      %819 = vmatprep.subr.bf16.mxu0 0
      %820 = vmatpush1.bf16.msra.mxu0 0
      %821 = vmatprep.subr.bf16.mxu0 0
      %822 = vmatpush1.bf16.msra.mxu0 0
      %823 = vmatprep.subr.bf16.mxu0 0
      %824 = vmatpush1.bf16.msra.mxu0 0
      %825 = vmatprep.subr.bf16.mxu0 0
      %826 = vmatpush1.bf16.msra.mxu0 0
      %827 = vmatprep.mubr.bf16.mxu0 0
      %828 = vmatmul.mubr.bf16.gmra.mrb[0].mxu0 %v787
      %v829 = vpop.f32.mrb[0].mxu0
      %v830 = vadd.f32 0.0, %v829
      %v831 = vpop.f32.mrb[0].mxu0
      %v832 = vpop.f32.mrb[0].mxu0
      %v833 = vadd.f32 0.0, %v832
      %v834 = vpop.f32.mrb[0].mxu0
      %835 = vmatprep.mubr.bf16.mxu0 0
      %836 = vmatmul.mubr.bf16.gmra.mrb[0].mxu0 %v790
      %v837 = vpop.f32.mrb[0].mxu0
      %v838 = vadd.f32 0.0, %v837
      %v839 = vpop.f32.mrb[0].mxu0
      %v840 = vpop.f32.mrb[0].mxu0
      %v841 = vpop.f32.mrb[0].mxu0
      %842 = vdwg.mxu0
      %v843 = vadd.f32 %v774, %v830
      %v844 = vadd.f32 %v775, %v833
      %v845 = vadd.f32 %v776, %v838
      %v846 = vld [vmem:[%s2] sm:$0x1]
      %v848 = vlaneseq
      %v849 = vshrl.u32 %v848, 7
      %v850 = vsub.s32 0, %v849
      %v851 = vrot.slane %v846, %v850
      %v853 = vadd.f32 %v843, %v851
      %v854 = vadd.f32 %v844, %v851
      %v855 = vadd.f32 %v845, %v851
      %v856 = vmax.f32 %v853, 0.0
      %v857 = vmax.f32 %v854, 0.0
      %v858 = vmax.f32 %v855, 0.0
      %v859 = vpack.c.bf16 %v857, %v856
      %v860 = vpack.c.bf16 %v858, %v858
      %v863 = vunpack.c.l.b16 %v859
      %v864 = vunpack.c.h.b16 %v859
      %v865 = vunpack.c.l.b16 %v860
      %v866 = vpack.c.b16 %v863, %v863
      %v867 = vpack.c.b16 %v864, %v864
      %v868 = vpack.c.b16 %v865, %v865
      %vm872 = vcmask 60416
      %873 = vst.msk [vmem:[%s170] sm:$0xf] %vm872, %v866
      %874 = vst.msk [vmem:[%s170 + $0x4] sm:$0xf] %vm872, %v867
      %875 = vst.msk [vmem:[%s170 + $0x8] sm:$0xf] %vm872, %v868
      %p876 = scmp.lt.s32.totalorder %s14, 1
      %s877 = scalar_select %p876, %s14, 1
      %s878 = smul.addr %s877, 3
      %s879 = smul.addr %s878, 4
      %s880 = scalar_lea.vmem %s3, %s879
      // Predicated region
      $region33: #{bottleneck_forward.4} parent=31 // pred_check
        %p881 = pneg %p100
      $region34: #{bottleneck_forward.4} parent=31 // pred_check_branch
        %883 = sbr.rel (%p881) target = $region36
      $region35: #{bottleneck_forward.4} parent=31 // pred_region
        _
      $region36: #{bottleneck_forward.4} parent=31 // pred_fallthru
        _
    $region32: #{bottleneck_forward.4} parent=5 // pred_fallthru
      _
    %p884 = scmp.le.s32.totalorder 2, %s9
    // Predicated region
    $region37: #{bottleneck_forward.4} parent=5 // pred_check
      %p885 = pneg %p884
    $region38: #{bottleneck_forward.4} parent=5 // pred_check_branch
      %887 = sbr.rel (%p885) target = $region40
    $region39: #{bottleneck_forward.4} parent=5 // pred_region
      %s888 = ssub.s32 %s9, 2
      // Predicated region
      $region41: #{bottleneck_forward.4} parent=39 // pred_check
        %p889 = pneg %p106
      $region42: #{bottleneck_forward.4} parent=39 // pred_check_branch
        %891 = sbr.rel (%p889) target = $region44
      $region43: #{bottleneck_forward.4} parent=39 // pred_region
        %p892 = scmp.lt.s32.totalorder %s15, 1
        %s893 = scalar_select %p892, %s15, 1
        %s894 = smul.addr %s893, 3
        %s895 = smul.addr %s894, 4
        %s896 = scalar_lea.vmem %s3, %s895
      $region44: #{bottleneck_forward.4} parent=39 // pred_fallthru
        _
    $region40: #{bottleneck_forward.4} parent=5 // pred_fallthru
      _
  $region6: #{bottleneck_forward.4} parent=0 // loop_footer
    %s13 = sadd.s32 1, %s9
  $region7: #{bottleneck_forward.4} parent=0 // loop_footer_branch
    %8 = sbr.rel target = $region3
  $region8: #{bottleneck_forward.4} parent=0 // loop_exit
    _

// kernel: bottleneck_forward.5
$region0: #{bottleneck_forward.5}
  #allocation0 [shape = 'u32[]', space=smem, size = 0x4, offset = 0x4, fixed_abs, tag = 'smem constant byte address 0x4 - core index']
  #allocation1 [shape = 'u32[144,128]{1,0:T(1,128)}', space=vmem, size = 0x12000, scoped, tag = 'internal scratch']
  %s0 = inlined_call_operand.vmem [shape: bf16[32,8], index: 0, kind: input, shape index: {}]
  %s1 = inlined_call_operand.vmem [shape: bf16[8,32], index: 1, kind: input, shape index: {}]
  %s2 = inlined_call_operand.vmem [shape: bf16[32,16], index: 2, kind: input, shape index: {}]
  %s3 = inlined_call_operand.vmem [shape: bf16[16,32], index: 3, kind: input, shape index: {}]
  %s4 = inlined_call_operand.vmem [shape: f32[1,32], index: 4, kind: input, shape index: {}]
  %s5 = inlined_call_operand.hbm [shape: f32[32,32], index: 5, kind: output, shape index: {}]
  %s6 = sld [smem:[#allocation0]]
  $region30: #{bottleneck_forward.5} parent=0
    _
  %s8 = ssub.s32 1, %s6
  %s9 = scalar_select 0, %s8, %s6
  $region1: #{bottleneck_forward.5} parent=0
    #allocation2 [shape = 'u8[16384]{0}', space=vmem, size = 0x4000, scoped, tag = 'output window, operand 0, single buffered']
    #allocation3 [shape = 's32[1]{0}', space=sflag, size = 0x4, scoped, tag = 'scoped memory for bottleneck_forward.5']
    %10 = vsyncpa [#allocation3], 0
    // Predicated region
    $region2: #{bottleneck_forward.5} parent=1 // pred_check
      _
    $region3: #{bottleneck_forward.5} parent=1 // pred_check_branch
      %12 = sbr.rel (0) target = $region5
    $region4: #{bottleneck_forward.5} parent=1 // pred_region
      _
    $region5: #{bottleneck_forward.5} parent=1 // pred_fallthru
      _
    // Predicated region
    $region6: #{bottleneck_forward.5} parent=1 // pred_check
      _
    $region7: #{bottleneck_forward.5} parent=1 // pred_check_branch
      %14 = sbr.rel (0) target = $region9
    $region8: #{bottleneck_forward.5} parent=1 // pred_region
      _
    $region9: #{bottleneck_forward.5} parent=1 // pred_fallthru
      _
    // Predicated region
    $region10: #{bottleneck_forward.5} parent=1 // pred_check
      _
    $region11: #{bottleneck_forward.5} parent=1 // pred_check_branch
      %16 = sbr.rel (0) target = $region13
    $region12: #{bottleneck_forward.5} parent=1 // pred_region
      _
    $region13: #{bottleneck_forward.5} parent=1 // pred_fallthru
      _
    // Predicated region
    $region14: #{bottleneck_forward.5} parent=1 // pred_check
      _
    $region15: #{bottleneck_forward.5} parent=1 // pred_check_branch
      %18 = sbr.rel (0) target = $region17
    $region16: #{bottleneck_forward.5} parent=1 // pred_region
      _
    $region17: #{bottleneck_forward.5} parent=1 // pred_fallthru
      _
    // Predicated region
    $region18: #{bottleneck_forward.5} parent=1 // pred_check
      _
    $region19: #{bottleneck_forward.5} parent=1 // pred_check_branch
      %20 = sbr.rel (0) target = $region21
    $region20: #{bottleneck_forward.5} parent=1 // pred_region
      _
    $region21: #{bottleneck_forward.5} parent=1 // pred_fallthru
      _
    %v22 = vld [vmem:[%s0] sm:$0xf]
    %v23 = vld [vmem:[%s0 + $0x4] sm:$0xf]
    %v24 = vld [vmem:[%s0 + $0x8] sm:$0xf]
    %v25 = vld [vmem:[%s0 + $0xc] sm:$0xf]
    %v26 = vld [vmem:[%s1] sm:$0xf]
    %v27 = vld [vmem:[%s2] sm:$0xf]
    %v28 = vld [vmem:[%s2 + $0x4] sm:$0xf]
    %v29 = vld [vmem:[%s2 + $0x8] sm:$0xf]
    %v30 = vld [vmem:[%s2 + $0xc] sm:$0xf]
    %v31 = vld [vmem:[%s3] sm:$0xf]
    %v32 = vld [vmem:[%s3 + $0x4] sm:$0xf]
    %v37 = vunpack.c.l.b16 %v27
    %v38 = vunpack.c.l.b16 %v28
    %v39 = vunpack.c.l.b16 %v29
    %v40 = vunpack.c.l.b16 %v30
    %v41 = vpack.c.b16 %v38, %v37
    %v42 = vpack.c.b16 %v40, %v39
    %v45 = vunpack.c.l.b16 %v31
    %v46 = vunpack.c.l.b16 %v32
    %v47 = vpack.c.b16 %v46, %v45
    %vm49 = vcmask 130048
    %v51 = vsel %vm49, %v41, 0
    %v54 = vsel %vm49, %v42, 0
    %56 = vmatprep.subr.bf16.mxu0 0
    %57 = vmatpush1.bf16.msra.mxu0 %v47
    %58 = vmatprep.subr.bf16.mxu0 0
    %59 = vmatpush1.bf16.msra.mxu0 0
    %60 = vmatprep.subr.bf16.mxu0 0
    %61 = vmatpush1.bf16.msra.mxu0 0
    %62 = vmatprep.subr.bf16.mxu0 0
    %63 = vmatpush1.bf16.msra.mxu0 0
    %64 = vmatprep.subr.bf16.mxu0 0
    %65 = vmatpush1.bf16.msra.mxu0 0
    %66 = vmatprep.subr.bf16.mxu0 0
    %67 = vmatpush1.bf16.msra.mxu0 0
    %68 = vmatprep.subr.bf16.mxu0 0
    %69 = vmatpush1.bf16.msra.mxu0 0
    %70 = vmatprep.subr.bf16.mxu0 0
    %71 = vmatpush1.bf16.msra.mxu0 0
    %72 = vmatprep.subr.bf16.mxu0 0
    %73 = vmatpush1.bf16.msra.mxu0 0
    %74 = vmatprep.subr.bf16.mxu0 0
    %75 = vmatpush1.bf16.msra.mxu0 0
    %76 = vmatprep.subr.bf16.mxu0 0
    %77 = vmatpush1.bf16.msra.mxu0 0
    %78 = vmatprep.subr.bf16.mxu0 0
    %79 = vmatpush1.bf16.msra.mxu0 0
    %80 = vmatprep.subr.bf16.mxu0 0
    %81 = vmatpush1.bf16.msra.mxu0 0
    %82 = vmatprep.subr.bf16.mxu0 0
    %83 = vmatpush1.bf16.msra.mxu0 0
    %84 = vmatprep.subr.bf16.mxu0 0
    %85 = vmatpush1.bf16.msra.mxu0 0
    %86 = vmatprep.subr.bf16.mxu0 0
    %87 = vmatpush1.bf16.msra.mxu0 0
    %88 = vmatprep.mubr.bf16.mxu0 0
    %89 = vmatmul.mubr.bf16.gmra.mrb[0].mxu0 %v51
    %v90 = vpop.f32.mrb[0].mxu0
    %v91 = vadd.f32 0.0, %v90
    %v92 = vpop.f32.mrb[0].mxu0
    %v93 = vpop.f32.mrb[0].mxu0
    %v94 = vadd.f32 0.0, %v93
    %v95 = vpop.f32.mrb[0].mxu0
    %96 = vmatprep.mubr.bf16.mxu0 0
    %97 = vmatmul.mubr.bf16.gmra.mrb[0].mxu0 %v54
    %v98 = vpop.f32.mrb[0].mxu0
    %v99 = vadd.f32 0.0, %v98
    %v100 = vpop.f32.mrb[0].mxu0
    %v101 = vpop.f32.mrb[0].mxu0
    %v102 = vadd.f32 0.0, %v101
    %v103 = vpop.f32.mrb[0].mxu0
    %104 = vdwg.mxu0
    %v109 = vunpack.c.l.b16 %v22
    %v110 = vunpack.c.l.b16 %v23
    %v111 = vunpack.c.l.b16 %v24
    %v112 = vunpack.c.l.b16 %v25
    %v113 = vpack.c.b16 %v110, %v109
    %v114 = vpack.c.b16 %v112, %v111
    %vm115 = vcmask 64512
    %v117 = vsel %vm115, %v113, 0
    %v120 = vsel %vm115, %v114, 0
    %vm122 = vcmask 1043456
    %v124 = vsel %vm122, %v26, 0
    %126 = vmatprep.subr.bf16.mxu0 0
    %127 = vmatpush1.bf16.msra.mxu0 %v124
    %128 = vmatprep.subr.bf16.mxu0 0
    %129 = vmatpush1.bf16.msra.mxu0 0
    %130 = vmatprep.subr.bf16.mxu0 0
    %131 = vmatpush1.bf16.msra.mxu0 0
    %132 = vmatprep.subr.bf16.mxu0 0
    %133 = vmatpush1.bf16.msra.mxu0 0
    %134 = vmatprep.subr.bf16.mxu0 0
    %135 = vmatpush1.bf16.msra.mxu0 0
    %136 = vmatprep.subr.bf16.mxu0 0
    %137 = vmatpush1.bf16.msra.mxu0 0
    %138 = vmatprep.subr.bf16.mxu0 0
    %139 = vmatpush1.bf16.msra.mxu0 0
    %140 = vmatprep.subr.bf16.mxu0 0
    %141 = vmatpush1.bf16.msra.mxu0 0
    %142 = vmatprep.subr.bf16.mxu0 0
    %143 = vmatpush1.bf16.msra.mxu0 0
    %144 = vmatprep.subr.bf16.mxu0 0
    %145 = vmatpush1.bf16.msra.mxu0 0
    %146 = vmatprep.subr.bf16.mxu0 0
    %147 = vmatpush1.bf16.msra.mxu0 0
    %148 = vmatprep.subr.bf16.mxu0 0
    %149 = vmatpush1.bf16.msra.mxu0 0
    %150 = vmatprep.subr.bf16.mxu0 0
    %151 = vmatpush1.bf16.msra.mxu0 0
    %152 = vmatprep.subr.bf16.mxu0 0
    %153 = vmatpush1.bf16.msra.mxu0 0
    %154 = vmatprep.subr.bf16.mxu0 0
    %155 = vmatpush1.bf16.msra.mxu0 0
    %156 = vmatprep.subr.bf16.mxu0 0
    %157 = vmatpush1.bf16.msra.mxu0 0
    %158 = vmatprep.mubr.bf16.mxu0 0
    %159 = vmatmul.mubr.bf16.gmra.mrb[0].mxu0 %v117
    %v160 = vpop.f32.mrb[0].mxu0
    %v161 = vadd.f32 %v91, %v160
    %v162 = vpop.f32.mrb[0].mxu0
    %v163 = vpop.f32.mrb[0].mxu0
    %v164 = vadd.f32 %v94, %v163
    %v165 = vpop.f32.mrb[0].mxu0
    %166 = vmatprep.mubr.bf16.mxu0 0
    %167 = vmatmul.mubr.bf16.gmra.mrb[0].mxu0 %v120
    %v168 = vpop.f32.mrb[0].mxu0
    %v169 = vadd.f32 %v99, %v168
    %v170 = vpop.f32.mrb[0].mxu0
    %v171 = vpop.f32.mrb[0].mxu0
    %v172 = vadd.f32 %v102, %v171
    %v173 = vpop.f32.mrb[0].mxu0
    %174 = vdwg.mxu0
    %v175 = vld [vmem:[%s4] sm:$0x1]
    %v177 = vlaneseq
    %v178 = vshrl.u32 %v177, 7
    %v179 = vsub.s32 0, %v178
    %v180 = vrot.slane %v175, %v179
    %v182 = vadd.f32 %v161, %v180
    %v183 = vadd.f32 %v164, %v180
    %v184 = vadd.f32 %v169, %v180
    %v185 = vadd.f32 %v172, %v180
    %v186 = vmax.f32 %v182, 0.0
    %v187 = vmax.f32 %v183, 0.0
    %v188 = vmax.f32 %v184, 0.0
    %v189 = vmax.f32 %v185, 0.0
    %vm190 = vcmask 261120
    %191 = vst.msk [vmem:[#allocation2] sm:$0xff] %vm190, %v186
    %192 = vst.msk [vmem:[#allocation2 + $0x8] sm:$0xff] %vm190, %v187
    %193 = vst.msk [vmem:[#allocation2 + $0x10] sm:$0xff] %vm190, %v188
    %194 = vst.msk [vmem:[#allocation2 + $0x18] sm:$0xff] %vm190, %v189
    // Predicated region
    $region22: #{bottleneck_forward.5} parent=1 // pred_check
      _
    $region23: #{bottleneck_forward.5} parent=1 // pred_check_branch
      %196 = sbr.rel (0) target = $region25
    $region24: #{bottleneck_forward.5} parent=1 // pred_region
      %s198 = ssub.s32 512, 512
      %199 = vsyncadd [#allocation3], %s198
      %s200 = sshll.u32 [#allocation2], 4
      %s201 = int_to_ptr.vmem [resolvable:$true] %s200
      %206 = dma.vmem_to_hbm [thread:$0]  %s201, 512, %s5, [#allocation3], 128, 128, 8
    $region25: #{bottleneck_forward.5} parent=1 // pred_fallthru
      _
    // Predicated region
    $region26: #{bottleneck_forward.5} parent=1 // pred_check
      _
    $region27: #{bottleneck_forward.5} parent=1 // pred_check_branch
      %208 = sbr.rel (0) target = $region29
    $region28: #{bottleneck_forward.5} parent=1 // pred_region
      %209 = dma.done [#allocation3], 512
    $region29: #{bottleneck_forward.5} parent=1 // pred_fallthru
      _
    %210 = vsyncpa [#allocation3], 1

</llo_original>
